<compile_context>
chip_gen: v6e
topology: v6e:2x2x1
jax: 0.10.0
libtpu: 0.0.40
codegen_flags: <defaults>
</compile_context>

<pallas_src>
import jax
import jax.numpy as jnp
from jax import lax
from jax.experimental import pallas as pl
from jax.experimental.pallas import tpu as pltpu


def lstm_kernel(pre_ref, whh_ref, hout_ref):
    # pre_ref:  (T, Bt, 4*Hp)  precomputed x*W_ih^T + (b_ih+b_hh), time-major,
    #                          gate order (i, f, o, g), zero-padded lanes.
    # whh_ref:  (Hp, 4*Hp)     W_hh^T, gate order (i, f, o, g), zero-padded.
    # hout_ref: (Bt, Hp)       final hidden state.
    T, Bt, _ = pre_ref.shape
    Hp = whh_ref.shape[0]

    h0 = jnp.zeros((Bt, Hp), jnp.float32)
    c0 = jnp.zeros((Bt, Hp), jnp.float32)

    def step(t, carry):
        h, c = carry
        gates = pre_ref[t] + jnp.dot(h, whh_ref[...],
                                     preferred_element_type=jnp.float32)
        # (i, f, o) are contiguous -> one sigmoid over (Bt, 3*Hp); g is tanh.
        sig = jax.nn.sigmoid(gates[:, :3 * Hp])
        g = jnp.tanh(gates[:, 3 * Hp:])
        i = sig[:, 0 * Hp:1 * Hp]
        f = sig[:, 1 * Hp:2 * Hp]
        o = sig[:, 2 * Hp:3 * Hp]
        c_new = f * c + i * g
        h_new = o * jnp.tanh(c_new)
        return (h_new, c_new)

    # Short fixed trip count -> fully unroll so pre_ref indices are static and
    # the LLO scheduler sees across iterations.
    h, _ = lax.fori_loop(0, T, step, (h0, c0), unroll=True)
    hout_ref[...] = h


# PyTorch gate order is (i, f, g, o); we reorder to (i, f, o, g) so sigmoid
# gates are contiguous and the tanh gate is last.
_GATE_ORDER = (0, 1, 3, 2)


def _prep_gate_blocks(w, H, Hp):
    """Split stacked (i,f,g,o) gate blocks, zero-pad axis0 H->Hp, reorder to (i,f,o,g)."""
    blocks = [w[k * H:(k + 1) * H] for k in range(4)]
    pad_width = [(0, Hp - H)] + [(0, 0)] * (w.ndim - 1)
    blocks = [jnp.pad(b, pad_width) for b in blocks]
    return jnp.concatenate([blocks[k] for k in _GATE_ORDER], axis=0)


def lstm_forward(x, params):
    """x: (B, T) float32 (== seq.view(-1, win_len, 1)).  Returns (B, 1) float32."""
    w_ih, w_hh, b_ih, b_hh, w_out, b_out = params
    B, T = x.shape
    H = w_hh.shape[1]

    # --- padding: H -> multiple of 128 (lanes), B -> multiple of 8 (sublanes) ---
    Hp = ((H + 127) // 128) * 128
    if B <= 128:
        Bp = max(8, ((B + 7) // 8) * 8)
        Bt = Bp
    else:
        Bp = ((B + 127) // 128) * 128
        Bt = 128
    grid = (Bp // Bt,)

    # --- weight prep (reordered to i,f,o,g; padded lanes are zero) ---
    wih_p = _prep_gate_blocks(w_ih, H, Hp)                    # (4Hp, 1)
    whh_p = _prep_gate_blocks(w_hh, H, Hp)                    # (4Hp, H)
    whh_p = jnp.pad(whh_p, ((0, 0), (0, Hp - H)))             # (4Hp, Hp)
    whh_t = jnp.transpose(whh_p)                              # (Hp, 4Hp)
    b_p = _prep_gate_blocks(b_ih + b_hh, H, Hp)               # (4Hp,)

    # --- hoist input projection + bias out of the recurrence ---
    x_p = jnp.pad(x.astype(jnp.float32), ((0, Bp - B), (0, 0)))   # (Bp, T)
    x_tm = jnp.transpose(x_p)                                     # (T, Bp)
    pre_gates = (x_tm[:, :, None] * jnp.transpose(wih_p)[None, :, :]
                 + b_p[None, None, :])                            # (T, Bp, 4Hp)

    cost = pl.CostEstimate(
        flops=int(T * 2 * Bp * Hp * 4 * Hp + T * Bp * 4 * Hp),
        transcendentals=int(T * 5 * Bp * Hp),
        bytes_accessed=int(4 * (pre_gates.size + whh_t.size + Bp * Hp)),
    )

    h_final = pl.pallas_call(
        lstm_kernel,
        out_shape=jax.ShapeDtypeStruct((Bp, Hp), jnp.float32),
        grid=grid,
        in_specs=[
            pl.BlockSpec((T, Bt, 4 * Hp), lambda i: (0, i, 0)),   # pre_gates tile
            pl.BlockSpec((Hp, 4 * Hp), lambda i: (0, 0)),         # resident weights
        ],
        out_specs=pl.BlockSpec((Bt, Hp), lambda i: (i, 0)),
        compiler_params=pltpu.CompilerParams(
            dimension_semantics=("parallel",)),
        cost_estimate=cost,
    )(pre_gates, whh_t)

    # 1-wide output Linear done in the wrapper (keeps kernel output lane-dense).
    h_valid = h_final[:B, :H]
    return h_valid @ jnp.transpose(w_out) + b_out[None, :]


def lstm_ref(x, params):
    """Pure-JAX reference matching torch.nn.LSTM + Linear semantics."""
    w_ih, w_hh, b_ih, b_hh, w_out, b_out = params
    B, T = x.shape
    H = w_hh.shape[1]
    h = jnp.zeros((B, H), jnp.float32)
    c = jnp.zeros((B, H), jnp.float32)

    def step(carry, x_t):
        h, c = carry
        gates = x_t[:, None] @ w_ih.T + h @ w_hh.T + b_ih + b_hh
        i = jax.nn.sigmoid(gates[:, 0 * H:1 * H])
        f = jax.nn.sigmoid(gates[:, 1 * H:2 * H])
        g = jnp.tanh(gates[:, 2 * H:3 * H])
        o = jax.nn.sigmoid(gates[:, 3 * H:4 * H])
        c = f * c + i * g
        h = o * jnp.tanh(c)
        return (h, c), None

    (h, _), _ = lax.scan(step, (h, c), jnp.transpose(x))
    return h @ w_out.T + b_out


def init_params(key, hidden_dim):
    """Deterministic PyTorch-style init: U(-1/sqrt(H), 1/sqrt(H))."""
    H = hidden_dim
    bound = 1.0 / jnp.sqrt(jnp.float32(H))
    ks = jax.random.split(key, 6)
    w_ih = jax.random.uniform(ks[0], (4 * H, 1), jnp.float32, -bound, bound)
    w_hh = jax.random.uniform(ks[1], (4 * H, H), jnp.float32, -bound, bound)
    b_ih = jax.random.uniform(ks[2], (4 * H,), jnp.float32, -bound, bound)
    b_hh = jax.random.uniform(ks[3], (4 * H,), jnp.float32, -bound, bound)
    w_out = jax.random.uniform(ks[4], (1, H), jnp.float32, -bound, bound)
    b_out = jax.random.uniform(ks[5], (1,), jnp.float32, -bound, bound)
    return (w_ih, w_hh, b_ih, b_hh, w_out, b_out)


if __name__ == "__main__":
    batch = 2
    win_len = 8
    hidden_dim = 32

    key = jax.random.PRNGKey(0)
    k_x, k_p = jax.random.split(key)
    x = jax.random.normal(k_x, (batch, win_len), jnp.float32)  # == seq.view(-1, win_len, 1)
    params = init_params(k_p, hidden_dim)

    out = lstm_forward(x, params)
    out = jax.block_until_ready(out)

    ref = lstm_ref(x, params)
    assert out.shape == (batch, 1)
    assert jnp.allclose(out, ref, atol=1e-5, rtol=1e-5), (out, ref)

    print("KERNEL_OK")
</pallas_src>

<mosaic_0001>
module attributes {stable_mosaic.version = 11 : i64} {
  func.func @lstm_kernel(%arg0: i32, %arg1: memref<8x8x512xf32, #tpu.memory_space<vmem>>, %arg2: memref<128x512xf32, #tpu.memory_space<vmem>>, %arg3: memref<8x128xf32, #tpu.memory_space<vmem>>) attributes {dimension_semantics = [#tpu.dimension_semantics<parallel>], iteration_bounds = array<i64: 1>, scalar_prefetch = 0 : i64, scratch_operands = 0 : i64, tpu.core_type = #tpu.core_type<tc>, window_params = [{transform_indices = @transform_0, window_bounds = array<i64: 8, 8, 512>}, {pipeline_mode = #tpu.pipeline_mode<synchronous>, transform_indices = @transform_1, window_bounds = array<i64: 128, 512>}, {transform_indices = @transform_2, window_bounds = array<i64: 8, 128>}]} {
    %cst = arith.constant 0.000000e+00 : f32
    %0 = vector.broadcast %cst : f32 to vector<8x128xf32>
    %cst_0 = arith.constant 0.000000e+00 : f32
    %1 = vector.broadcast %cst_0 : f32 to vector<8x128xf32>
    %c0_i32 = arith.constant 0 : i32
    %2 = arith.index_cast %c0_i32 : i32 to index
    %c0 = arith.constant 0 : index
    %c0_1 = arith.constant 0 : index
    %3 = vector.load %arg1[%2, %c0, %c0_1] : memref<8x8x512xf32, #tpu.memory_space<vmem>>, vector<1x8x512xf32>
    %4 = vector.shape_cast %3 : vector<1x8x512xf32> to vector<8x512xf32>
    %c0_2 = arith.constant 0 : index
    %c0_3 = arith.constant 0 : index
    %5 = vector.load %arg2[%c0_2, %c0_3] : memref<128x512xf32, #tpu.memory_space<vmem>>, vector<128x512xf32>
    %cst_4 = arith.constant dense<0.000000e+00> : vector<8x512xf32>
    %6 = tpu.matmul %0, %5, %cst_4 {dimension_numbers = #tpu.dot_dimension_numbers<[1], [0], [0], [1], [0, 0, 1, 1], [], []>} : vector<8x128xf32>, vector<128x512xf32>, vector<8x512xf32> -> vector<8x512xf32>
    %7 = arith.addf %4, %6 : vector<8x512xf32>
    %8 = vector.extract_strided_slice %7 {offsets = [0, 0], sizes = [8, 384], strides = [1, 1]} : vector<8x512xf32> to vector<8x384xf32>
    %9 = arith.negf %8 : vector<8x384xf32>
    %10 = math.exp %9 : vector<8x384xf32>
    %cst_5 = arith.constant 1.000000e+00 : f32
    %11 = vector.broadcast %cst_5 : f32 to vector<8x384xf32>
    %12 = arith.addf %11, %10 : vector<8x384xf32>
    %13 = arith.divf %11, %12 : vector<8x384xf32>
    %14 = vector.extract_strided_slice %7 {offsets = [0, 384], sizes = [8, 128], strides = [1, 1]} : vector<8x512xf32> to vector<8x128xf32>
    %15 = math.tanh %14 : vector<8x128xf32>
    %16 = vector.extract_strided_slice %13 {offsets = [0, 0], sizes = [8, 128], strides = [1, 1]} : vector<8x384xf32> to vector<8x128xf32>
    %17 = vector.extract_strided_slice %13 {offsets = [0, 128], sizes = [8, 128], strides = [1, 1]} : vector<8x384xf32> to vector<8x128xf32>
    %18 = vector.extract_strided_slice %13 {offsets = [0, 256], sizes = [8, 128], strides = [1, 1]} : vector<8x384xf32> to vector<8x128xf32>
    %19 = arith.mulf %17, %1 : vector<8x128xf32>
    %20 = arith.mulf %16, %15 : vector<8x128xf32>
    %21 = arith.addf %19, %20 : vector<8x128xf32>
    %22 = math.tanh %21 : vector<8x128xf32>
    %23 = arith.mulf %18, %22 : vector<8x128xf32>
    %c1_i32 = arith.constant 1 : i32
    %24 = arith.index_cast %c1_i32 : i32 to index
    %c0_6 = arith.constant 0 : index
    %c0_7 = arith.constant 0 : index
    %25 = vector.load %arg1[%24, %c0_6, %c0_7] : memref<8x8x512xf32, #tpu.memory_space<vmem>>, vector<1x8x512xf32>
    %26 = vector.shape_cast %25 : vector<1x8x512xf32> to vector<8x512xf32>
    %c0_8 = arith.constant 0 : index
    %c0_9 = arith.constant 0 : index
    %27 = vector.load %arg2[%c0_8, %c0_9] : memref<128x512xf32, #tpu.memory_space<vmem>>, vector<128x512xf32>
    %cst_10 = arith.constant dense<0.000000e+00> : vector<8x512xf32>
    %28 = tpu.matmul %23, %27, %cst_10 {dimension_numbers = #tpu.dot_dimension_numbers<[1], [0], [0], [1], [0, 0, 1, 1], [], []>} : vector<8x128xf32>, vector<128x512xf32>, vector<8x512xf32> -> vector<8x512xf32>
    %29 = arith.addf %26, %28 : vector<8x512xf32>
    %30 = vector.extract_strided_slice %29 {offsets = [0, 0], sizes = [8, 384], strides = [1, 1]} : vector<8x512xf32> to vector<8x384xf32>
    %31 = arith.negf %30 : vector<8x384xf32>
    %32 = math.exp %31 : vector<8x384xf32>
    %cst_11 = arith.constant 1.000000e+00 : f32
    %33 = vector.broadcast %cst_11 : f32 to vector<8x384xf32>
    %34 = arith.addf %33, %32 : vector<8x384xf32>
    %35 = arith.divf %33, %34 : vector<8x384xf32>
    %36 = vector.extract_strided_slice %29 {offsets = [0, 384], sizes = [8, 128], strides = [1, 1]} : vector<8x512xf32> to vector<8x128xf32>
    %37 = math.tanh %36 : vector<8x128xf32>
    %38 = vector.extract_strided_slice %35 {offsets = [0, 0], sizes = [8, 128], strides = [1, 1]} : vector<8x384xf32> to vector<8x128xf32>
    %39 = vector.extract_strided_slice %35 {offsets = [0, 128], sizes = [8, 128], strides = [1, 1]} : vector<8x384xf32> to vector<8x128xf32>
    %40 = vector.extract_strided_slice %35 {offsets = [0, 256], sizes = [8, 128], strides = [1, 1]} : vector<8x384xf32> to vector<8x128xf32>
    %41 = arith.mulf %39, %21 : vector<8x128xf32>
    %42 = arith.mulf %38, %37 : vector<8x128xf32>
    %43 = arith.addf %41, %42 : vector<8x128xf32>
    %44 = math.tanh %43 : vector<8x128xf32>
    %45 = arith.mulf %40, %44 : vector<8x128xf32>
    %c2_i32 = arith.constant 2 : i32
    %46 = arith.index_cast %c2_i32 : i32 to index
    %c0_12 = arith.constant 0 : index
    %c0_13 = arith.constant 0 : index
    %47 = vector.load %arg1[%46, %c0_12, %c0_13] : memref<8x8x512xf32, #tpu.memory_space<vmem>>, vector<1x8x512xf32>
    %48 = vector.shape_cast %47 : vector<1x8x512xf32> to vector<8x512xf32>
    %c0_14 = arith.constant 0 : index
    %c0_15 = arith.constant 0 : index
    %49 = vector.load %arg2[%c0_14, %c0_15] : memref<128x512xf32, #tpu.memory_space<vmem>>, vector<128x512xf32>
    %cst_16 = arith.constant dense<0.000000e+00> : vector<8x512xf32>
    %50 = tpu.matmul %45, %49, %cst_16 {dimension_numbers = #tpu.dot_dimension_numbers<[1], [0], [0], [1], [0, 0, 1, 1], [], []>} : vector<8x128xf32>, vector<128x512xf32>, vector<8x512xf32> -> vector<8x512xf32>
    %51 = arith.addf %48, %50 : vector<8x512xf32>
    %52 = vector.extract_strided_slice %51 {offsets = [0, 0], sizes = [8, 384], strides = [1, 1]} : vector<8x512xf32> to vector<8x384xf32>
    %53 = arith.negf %52 : vector<8x384xf32>
    %54 = math.exp %53 : vector<8x384xf32>
    %cst_17 = arith.constant 1.000000e+00 : f32
    %55 = vector.broadcast %cst_17 : f32 to vector<8x384xf32>
    %56 = arith.addf %55, %54 : vector<8x384xf32>
    %57 = arith.divf %55, %56 : vector<8x384xf32>
    %58 = vector.extract_strided_slice %51 {offsets = [0, 384], sizes = [8, 128], strides = [1, 1]} : vector<8x512xf32> to vector<8x128xf32>
    %59 = math.tanh %58 : vector<8x128xf32>
    %60 = vector.extract_strided_slice %57 {offsets = [0, 0], sizes = [8, 128], strides = [1, 1]} : vector<8x384xf32> to vector<8x128xf32>
    %61 = vector.extract_strided_slice %57 {offsets = [0, 128], sizes = [8, 128], strides = [1, 1]} : vector<8x384xf32> to vector<8x128xf32>
    %62 = vector.extract_strided_slice %57 {offsets = [0, 256], sizes = [8, 128], strides = [1, 1]} : vector<8x384xf32> to vector<8x128xf32>
    %63 = arith.mulf %61, %43 : vector<8x128xf32>
    %64 = arith.mulf %60, %59 : vector<8x128xf32>
    %65 = arith.addf %63, %64 : vector<8x128xf32>
    %66 = math.tanh %65 : vector<8x128xf32>
    %67 = arith.mulf %62, %66 : vector<8x128xf32>
    %c3_i32 = arith.constant 3 : i32
    %68 = arith.index_cast %c3_i32 : i32 to index
    %c0_18 = arith.constant 0 : index
    %c0_19 = arith.constant 0 : index
    %69 = vector.load %arg1[%68, %c0_18, %c0_19] : memref<8x8x512xf32, #tpu.memory_space<vmem>>, vector<1x8x512xf32>
    %70 = vector.shape_cast %69 : vector<1x8x512xf32> to vector<8x512xf32>
    %c0_20 = arith.constant 0 : index
    %c0_21 = arith.constant 0 : index
    %71 = vector.load %arg2[%c0_20, %c0_21] : memref<128x512xf32, #tpu.memory_space<vmem>>, vector<128x512xf32>
    %cst_22 = arith.constant dense<0.000000e+00> : vector<8x512xf32>
    %72 = tpu.matmul %67, %71, %cst_22 {dimension_numbers = #tpu.dot_dimension_numbers<[1], [0], [0], [1], [0, 0, 1, 1], [], []>} : vector<8x128xf32>, vector<128x512xf32>, vector<8x512xf32> -> vector<8x512xf32>
    %73 = arith.addf %70, %72 : vector<8x512xf32>
    %74 = vector.extract_strided_slice %73 {offsets = [0, 0], sizes = [8, 384], strides = [1, 1]} : vector<8x512xf32> to vector<8x384xf32>
    %75 = arith.negf %74 : vector<8x384xf32>
    %76 = math.exp %75 : vector<8x384xf32>
    %cst_23 = arith.constant 1.000000e+00 : f32
    %77 = vector.broadcast %cst_23 : f32 to vector<8x384xf32>
    %78 = arith.addf %77, %76 : vector<8x384xf32>
    %79 = arith.divf %77, %78 : vector<8x384xf32>
    %80 = vector.extract_strided_slice %73 {offsets = [0, 384], sizes = [8, 128], strides = [1, 1]} : vector<8x512xf32> to vector<8x128xf32>
    %81 = math.tanh %80 : vector<8x128xf32>
    %82 = vector.extract_strided_slice %79 {offsets = [0, 0], sizes = [8, 128], strides = [1, 1]} : vector<8x384xf32> to vector<8x128xf32>
    %83 = vector.extract_strided_slice %79 {offsets = [0, 128], sizes = [8, 128], strides = [1, 1]} : vector<8x384xf32> to vector<8x128xf32>
    %84 = vector.extract_strided_slice %79 {offsets = [0, 256], sizes = [8, 128], strides = [1, 1]} : vector<8x384xf32> to vector<8x128xf32>
    %85 = arith.mulf %83, %65 : vector<8x128xf32>
    %86 = arith.mulf %82, %81 : vector<8x128xf32>
    %87 = arith.addf %85, %86 : vector<8x128xf32>
    %88 = math.tanh %87 : vector<8x128xf32>
    %89 = arith.mulf %84, %88 : vector<8x128xf32>
    %c4_i32 = arith.constant 4 : i32
    %90 = arith.index_cast %c4_i32 : i32 to index
    %c0_24 = arith.constant 0 : index
    %c0_25 = arith.constant 0 : index
    %91 = vector.load %arg1[%90, %c0_24, %c0_25] : memref<8x8x512xf32, #tpu.memory_space<vmem>>, vector<1x8x512xf32>
    %92 = vector.shape_cast %91 : vector<1x8x512xf32> to vector<8x512xf32>
    %c0_26 = arith.constant 0 : index
    %c0_27 = arith.constant 0 : index
    %93 = vector.load %arg2[%c0_26, %c0_27] : memref<128x512xf32, #tpu.memory_space<vmem>>, vector<128x512xf32>
    %cst_28 = arith.constant dense<0.000000e+00> : vector<8x512xf32>
    %94 = tpu.matmul %89, %93, %cst_28 {dimension_numbers = #tpu.dot_dimension_numbers<[1], [0], [0], [1], [0, 0, 1, 1], [], []>} : vector<8x128xf32>, vector<128x512xf32>, vector<8x512xf32> -> vector<8x512xf32>
    %95 = arith.addf %92, %94 : vector<8x512xf32>
    %96 = vector.extract_strided_slice %95 {offsets = [0, 0], sizes = [8, 384], strides = [1, 1]} : vector<8x512xf32> to vector<8x384xf32>
    %97 = arith.negf %96 : vector<8x384xf32>
    %98 = math.exp %97 : vector<8x384xf32>
    %cst_29 = arith.constant 1.000000e+00 : f32
    %99 = vector.broadcast %cst_29 : f32 to vector<8x384xf32>
    %100 = arith.addf %99, %98 : vector<8x384xf32>
    %101 = arith.divf %99, %100 : vector<8x384xf32>
    %102 = vector.extract_strided_slice %95 {offsets = [0, 384], sizes = [8, 128], strides = [1, 1]} : vector<8x512xf32> to vector<8x128xf32>
    %103 = math.tanh %102 : vector<8x128xf32>
    %104 = vector.extract_strided_slice %101 {offsets = [0, 0], sizes = [8, 128], strides = [1, 1]} : vector<8x384xf32> to vector<8x128xf32>
    %105 = vector.extract_strided_slice %101 {offsets = [0, 128], sizes = [8, 128], strides = [1, 1]} : vector<8x384xf32> to vector<8x128xf32>
    %106 = vector.extract_strided_slice %101 {offsets = [0, 256], sizes = [8, 128], strides = [1, 1]} : vector<8x384xf32> to vector<8x128xf32>
    %107 = arith.mulf %105, %87 : vector<8x128xf32>
    %108 = arith.mulf %104, %103 : vector<8x128xf32>
    %109 = arith.addf %107, %108 : vector<8x128xf32>
    %110 = math.tanh %109 : vector<8x128xf32>
    %111 = arith.mulf %106, %110 : vector<8x128xf32>
    %c5_i32 = arith.constant 5 : i32
    %112 = arith.index_cast %c5_i32 : i32 to index
    %c0_30 = arith.constant 0 : index
    %c0_31 = arith.constant 0 : index
    %113 = vector.load %arg1[%112, %c0_30, %c0_31] : memref<8x8x512xf32, #tpu.memory_space<vmem>>, vector<1x8x512xf32>
    %114 = vector.shape_cast %113 : vector<1x8x512xf32> to vector<8x512xf32>
    %c0_32 = arith.constant 0 : index
    %c0_33 = arith.constant 0 : index
    %115 = vector.load %arg2[%c0_32, %c0_33] : memref<128x512xf32, #tpu.memory_space<vmem>>, vector<128x512xf32>
    %cst_34 = arith.constant dense<0.000000e+00> : vector<8x512xf32>
    %116 = tpu.matmul %111, %115, %cst_34 {dimension_numbers = #tpu.dot_dimension_numbers<[1], [0], [0], [1], [0, 0, 1, 1], [], []>} : vector<8x128xf32>, vector<128x512xf32>, vector<8x512xf32> -> vector<8x512xf32>
    %117 = arith.addf %114, %116 : vector<8x512xf32>
    %118 = vector.extract_strided_slice %117 {offsets = [0, 0], sizes = [8, 384], strides = [1, 1]} : vector<8x512xf32> to vector<8x384xf32>
    %119 = arith.negf %118 : vector<8x384xf32>
    %120 = math.exp %119 : vector<8x384xf32>
    %cst_35 = arith.constant 1.000000e+00 : f32
    %121 = vector.broadcast %cst_35 : f32 to vector<8x384xf32>
    %122 = arith.addf %121, %120 : vector<8x384xf32>
    %123 = arith.divf %121, %122 : vector<8x384xf32>
    %124 = vector.extract_strided_slice %117 {offsets = [0, 384], sizes = [8, 128], strides = [1, 1]} : vector<8x512xf32> to vector<8x128xf32>
    %125 = math.tanh %124 : vector<8x128xf32>
    %126 = vector.extract_strided_slice %123 {offsets = [0, 0], sizes = [8, 128], strides = [1, 1]} : vector<8x384xf32> to vector<8x128xf32>
    %127 = vector.extract_strided_slice %123 {offsets = [0, 128], sizes = [8, 128], strides = [1, 1]} : vector<8x384xf32> to vector<8x128xf32>
    %128 = vector.extract_strided_slice %123 {offsets = [0, 256], sizes = [8, 128], strides = [1, 1]} : vector<8x384xf32> to vector<8x128xf32>
    %129 = arith.mulf %127, %109 : vector<8x128xf32>
    %130 = arith.mulf %126, %125 : vector<8x128xf32>
    %131 = arith.addf %129, %130 : vector<8x128xf32>
    %132 = math.tanh %131 : vector<8x128xf32>
    %133 = arith.mulf %128, %132 : vector<8x128xf32>
    %c6_i32 = arith.constant 6 : i32
    %134 = arith.index_cast %c6_i32 : i32 to index
    %c0_36 = arith.constant 0 : index
    %c0_37 = arith.constant 0 : index
    %135 = vector.load %arg1[%134, %c0_36, %c0_37] : memref<8x8x512xf32, #tpu.memory_space<vmem>>, vector<1x8x512xf32>
    %136 = vector.shape_cast %135 : vector<1x8x512xf32> to vector<8x512xf32>
    %c0_38 = arith.constant 0 : index
    %c0_39 = arith.constant 0 : index
    %137 = vector.load %arg2[%c0_38, %c0_39] : memref<128x512xf32, #tpu.memory_space<vmem>>, vector<128x512xf32>
    %cst_40 = arith.constant dense<0.000000e+00> : vector<8x512xf32>
    %138 = tpu.matmul %133, %137, %cst_40 {dimension_numbers = #tpu.dot_dimension_numbers<[1], [0], [0], [1], [0, 0, 1, 1], [], []>} : vector<8x128xf32>, vector<128x512xf32>, vector<8x512xf32> -> vector<8x512xf32>
    %139 = arith.addf %136, %138 : vector<8x512xf32>
    %140 = vector.extract_strided_slice %139 {offsets = [0, 0], sizes = [8, 384], strides = [1, 1]} : vector<8x512xf32> to vector<8x384xf32>
    %141 = arith.negf %140 : vector<8x384xf32>
    %142 = math.exp %141 : vector<8x384xf32>
    %cst_41 = arith.constant 1.000000e+00 : f32
    %143 = vector.broadcast %cst_41 : f32 to vector<8x384xf32>
    %144 = arith.addf %143, %142 : vector<8x384xf32>
    %145 = arith.divf %143, %144 : vector<8x384xf32>
    %146 = vector.extract_strided_slice %139 {offsets = [0, 384], sizes = [8, 128], strides = [1, 1]} : vector<8x512xf32> to vector<8x128xf32>
    %147 = math.tanh %146 : vector<8x128xf32>
    %148 = vector.extract_strided_slice %145 {offsets = [0, 0], sizes = [8, 128], strides = [1, 1]} : vector<8x384xf32> to vector<8x128xf32>
    %149 = vector.extract_strided_slice %145 {offsets = [0, 128], sizes = [8, 128], strides = [1, 1]} : vector<8x384xf32> to vector<8x128xf32>
    %150 = vector.extract_strided_slice %145 {offsets = [0, 256], sizes = [8, 128], strides = [1, 1]} : vector<8x384xf32> to vector<8x128xf32>
    %151 = arith.mulf %149, %131 : vector<8x128xf32>
    %152 = arith.mulf %148, %147 : vector<8x128xf32>
    %153 = arith.addf %151, %152 : vector<8x128xf32>
    %154 = math.tanh %153 : vector<8x128xf32>
    %155 = arith.mulf %150, %154 : vector<8x128xf32>
    %c7_i32 = arith.constant 7 : i32
    %156 = arith.index_cast %c7_i32 : i32 to index
    %c0_42 = arith.constant 0 : index
    %c0_43 = arith.constant 0 : index
    %157 = vector.load %arg1[%156, %c0_42, %c0_43] : memref<8x8x512xf32, #tpu.memory_space<vmem>>, vector<1x8x512xf32>
    %158 = vector.shape_cast %157 : vector<1x8x512xf32> to vector<8x512xf32>
    %c0_44 = arith.constant 0 : index
    %c0_45 = arith.constant 0 : index
    %159 = vector.load %arg2[%c0_44, %c0_45] : memref<128x512xf32, #tpu.memory_space<vmem>>, vector<128x512xf32>
    %cst_46 = arith.constant dense<0.000000e+00> : vector<8x512xf32>
    %160 = tpu.matmul %155, %159, %cst_46 {dimension_numbers = #tpu.dot_dimension_numbers<[1], [0], [0], [1], [0, 0, 1, 1], [], []>} : vector<8x128xf32>, vector<128x512xf32>, vector<8x512xf32> -> vector<8x512xf32>
    %161 = arith.addf %158, %160 : vector<8x512xf32>
    %162 = vector.extract_strided_slice %161 {offsets = [0, 0], sizes = [8, 384], strides = [1, 1]} : vector<8x512xf32> to vector<8x384xf32>
    %163 = arith.negf %162 : vector<8x384xf32>
    %164 = math.exp %163 : vector<8x384xf32>
    %cst_47 = arith.constant 1.000000e+00 : f32
    %165 = vector.broadcast %cst_47 : f32 to vector<8x384xf32>
    %166 = arith.addf %165, %164 : vector<8x384xf32>
    %167 = arith.divf %165, %166 : vector<8x384xf32>
    %168 = vector.extract_strided_slice %161 {offsets = [0, 384], sizes = [8, 128], strides = [1, 1]} : vector<8x512xf32> to vector<8x128xf32>
    %169 = math.tanh %168 : vector<8x128xf32>
    %170 = vector.extract_strided_slice %167 {offsets = [0, 0], sizes = [8, 128], strides = [1, 1]} : vector<8x384xf32> to vector<8x128xf32>
    %171 = vector.extract_strided_slice %167 {offsets = [0, 128], sizes = [8, 128], strides = [1, 1]} : vector<8x384xf32> to vector<8x128xf32>
    %172 = vector.extract_strided_slice %167 {offsets = [0, 256], sizes = [8, 128], strides = [1, 1]} : vector<8x384xf32> to vector<8x128xf32>
    %173 = arith.mulf %171, %153 : vector<8x128xf32>
    %174 = arith.mulf %170, %169 : vector<8x128xf32>
    %175 = arith.addf %173, %174 : vector<8x128xf32>
    %176 = math.tanh %175 : vector<8x128xf32>
    %177 = arith.mulf %172, %176 : vector<8x128xf32>
    %c8_i32 = arith.constant 8 : i32
    %c0_48 = arith.constant 0 : index
    %c0_49 = arith.constant 0 : index
    %178 = vector.load %arg3[%c0_48, %c0_49] : memref<8x128xf32, #tpu.memory_space<vmem>>, vector<8x128xf32>
    tpu.vector_store %arg3[%c0_48, %c0_49], %177 {strides = array<i32>} : memref<8x128xf32, #tpu.memory_space<vmem>>, vector<8x128xf32>,
    return
  }
  func.func @transform_0(%arg0: i32) -> (i32, i32, i32) {
    %c0_i32 = arith.constant 0 : i32
    %c0_i32_0 = arith.constant 0 : i32
    %c0_i32_1 = arith.constant 0 : i32
    return %c0_i32, %arg0, %c0_i32_0 : i32, i32, i32
  }
  func.func @transform_1(%arg0: i32) -> (i32, i32) {
    %c0_i32 = arith.constant 0 : i32
    %c0_i32_0 = arith.constant 0 : i32
    %c0_i32_1 = arith.constant 0 : i32
    return %c0_i32, %c0_i32_0 : i32, i32
  }
  func.func @transform_2(%arg0: i32) -> (i32, i32) {
    %c0_i32 = arith.constant 0 : i32
    %c0_i32_0 = arith.constant 0 : i32
    return %arg0, %c0_i32 : i32, i32
  }
}

</mosaic_0001>

<llo_original>
// kernel: tpu_custom_call.1
$region0: #{tpu_custom_call.1}
  #allocation0 [shape = 'u32[]', space=smem, size = 0x4, offset = 0x4, fixed_abs, tag = 'smem constant byte address 0x4 - core index']
  #allocation1 [shape = 'u32[144,128]{1,0:T(1,128)}', space=vmem, size = 0x12000, scoped, tag = 'internal scratch']
  %s0 = inlined_call_operand.hbm [shape: f32[8,8,512], index: 0, kind: input, shape index: {}]
  %s1 = inlined_call_operand.hbm [shape: f32[128,512], index: 1, kind: input, shape index: {}]
  %s2 = inlined_call_operand.hbm [shape: f32[8,128], index: 2, kind: output, shape index: {}]
  %s3 = sld [smem:[#allocation0]]
  $region26: #{tpu_custom_call.1} parent=0
    _
  %s5 = ssub.s32 1, %s3
  %s6 = scalar_select 0, %s5, %s3
  $region1: #{tpu_custom_call.1} parent=0
    #allocation2 [shape = 'u8[131072]{0}', space=vmem, size = 0x20000, scoped, tag = 'input window, operand 0, single buffered']
    #allocation3 [shape = 's32[1]{0}', space=sflag, size = 0x4, scoped, tag = 'scoped memory for tpu_custom_call.1']
    #allocation4 [shape = 's32[1]{0}', space=sflag, size = 0x4, scoped, tag = 'scoped memory for tpu_custom_call.1']
    #allocation5 [shape = 'u8[262144]{0}', space=vmem, size = 0x40000, scoped, tag = 'input window, operand 1, single buffered']
    #allocation6 [shape = 's32[1]{0}', space=sflag, size = 0x4, scoped, tag = 'scoped memory for tpu_custom_call.1']
    #allocation7 [shape = 'u8[4096]{0}', space=vmem, size = 0x1000, scoped, tag = 'output window, operand 0, single buffered']
    %7 = vsyncpa [#allocation3], 0
    %8 = vsyncpa [#allocation6], 0
    %9 = vsyncpa [#allocation4], 0
    // Predicated region
    $region2: #{tpu_custom_call.1} parent=1 // pred_check
      _
    $region3: #{tpu_custom_call.1} parent=1 // pred_check_branch
      %11 = sbr.rel (0) target = $region5
    $region4: #{tpu_custom_call.1} parent=1 // pred_region
      %s13 = ssub.s32 4096, 4096
      %14 = vsyncadd [#allocation3], %s13
      %s15 = sshll.u32 [#allocation2], 4
      %s16 = int_to_ptr.vmem [resolvable:$true] %s15
      %21 = dma.hbm_to_vmem [thread:$0]  %s0, 4096, %s16, [#allocation3], 512, 512, 32
    $region5: #{tpu_custom_call.1} parent=1 // pred_fallthru
      _
    // Predicated region
    $region6: #{tpu_custom_call.1} parent=1 // pred_check
      _
    $region7: #{tpu_custom_call.1} parent=1 // pred_check_branch
      %23 = sbr.rel (0) target = $region9
    $region8: #{tpu_custom_call.1} parent=1 // pred_region
      %s25 = ssub.s32 8192, 8192
      %26 = vsyncadd [#allocation6], %s25
      %s27 = sshll.u32 [#allocation5], 4
      %s28 = int_to_ptr.vmem [resolvable:$true] %s27
      %33 = dma.hbm_to_vmem [thread:$0]  %s1, 8192, %s28, [#allocation6], 512, 512, 32
    $region9: #{tpu_custom_call.1} parent=1 // pred_fallthru
      _
    // Predicated region
    $region10: #{tpu_custom_call.1} parent=1 // pred_check
      _
    $region11: #{tpu_custom_call.1} parent=1 // pred_check_branch
      %35 = sbr.rel (0) target = $region13
    $region12: #{tpu_custom_call.1} parent=1 // pred_region
      %36 = dma.done [#allocation3], 4096
    $region13: #{tpu_custom_call.1} parent=1 // pred_fallthru
      _
    // Predicated region
    $region14: #{tpu_custom_call.1} parent=1 // pred_check
      _
    $region15: #{tpu_custom_call.1} parent=1 // pred_check_branch
      %38 = sbr.rel (0) target = $region17
    $region16: #{tpu_custom_call.1} parent=1 // pred_region
      %39 = dma.done [#allocation6], 8192
    $region17: #{tpu_custom_call.1} parent=1 // pred_fallthru
      _
    %v40 = vld [vmem:[#allocation2] sm:$0xff]
    %v41 = vld [vmem:[#allocation2 + $0x8] sm:$0xff]
    %v42 = vld [vmem:[#allocation2 + $0x10] sm:$0xff]
    %v43 = vld [vmem:[#allocation2 + $0x18] sm:$0xff]
    %v44 = vld [vmem:[#allocation5] sm:$0xff]
    %v45 = vld [vmem:[#allocation5 + $0x8] sm:$0xff]
    %v46 = vld [vmem:[#allocation5 + $0x10] sm:$0xff]
    %v47 = vld [vmem:[#allocation5 + $0x18] sm:$0xff]
    %v48 = vld [vmem:[#allocation5 + $0x20] sm:$0xff]
    %v49 = vld [vmem:[#allocation5 + $0x28] sm:$0xff]
    %v50 = vld [vmem:[#allocation5 + $0x30] sm:$0xff]
    %v51 = vld [vmem:[#allocation5 + $0x38] sm:$0xff]
    %v52 = vld [vmem:[#allocation5 + $0x40] sm:$0xff]
    %v53 = vld [vmem:[#allocation5 + $0x48] sm:$0xff]
    %v54 = vld [vmem:[#allocation5 + $0x50] sm:$0xff]
    %v55 = vld [vmem:[#allocation5 + $0x58] sm:$0xff]
    %v56 = vld [vmem:[#allocation5 + $0x60] sm:$0xff]
    %v57 = vld [vmem:[#allocation5 + $0x68] sm:$0xff]
    %v58 = vld [vmem:[#allocation5 + $0x70] sm:$0xff]
    %v59 = vld [vmem:[#allocation5 + $0x78] sm:$0xff]
    %v60 = vld [vmem:[#allocation5 + $0x80] sm:$0xff]
    %v61 = vld [vmem:[#allocation5 + $0x88] sm:$0xff]
    %v62 = vld [vmem:[#allocation5 + $0x90] sm:$0xff]
    %v63 = vld [vmem:[#allocation5 + $0x98] sm:$0xff]
    %v64 = vld [vmem:[#allocation5 + $0xa0] sm:$0xff]
    %v65 = vld [vmem:[#allocation5 + $0xa8] sm:$0xff]
    %v66 = vld [vmem:[#allocation5 + $0xb0] sm:$0xff]
    %v67 = vld [vmem:[#allocation5 + $0xb8] sm:$0xff]
    %v68 = vld [vmem:[#allocation5 + $0xc0] sm:$0xff]
    %v69 = vld [vmem:[#allocation5 + $0xc8] sm:$0xff]
    %v70 = vld [vmem:[#allocation5 + $0xd0] sm:$0xff]
    %v71 = vld [vmem:[#allocation5 + $0xd8] sm:$0xff]
    %v72 = vld [vmem:[#allocation5 + $0xe0] sm:$0xff]
    %v73 = vld [vmem:[#allocation5 + $0xe8] sm:$0xff]
    %v74 = vld [vmem:[#allocation5 + $0xf0] sm:$0xff]
    %v75 = vld [vmem:[#allocation5 + $0xf8] sm:$0xff]
    %v76 = vld [vmem:[#allocation5 + $0x100] sm:$0xff]
    %v77 = vld [vmem:[#allocation5 + $0x108] sm:$0xff]
    %v78 = vld [vmem:[#allocation5 + $0x110] sm:$0xff]
    %v79 = vld [vmem:[#allocation5 + $0x118] sm:$0xff]
    %v80 = vld [vmem:[#allocation5 + $0x120] sm:$0xff]
    %v81 = vld [vmem:[#allocation5 + $0x128] sm:$0xff]
    %v82 = vld [vmem:[#allocation5 + $0x130] sm:$0xff]
    %v83 = vld [vmem:[#allocation5 + $0x138] sm:$0xff]
    %v84 = vld [vmem:[#allocation5 + $0x140] sm:$0xff]
    %v85 = vld [vmem:[#allocation5 + $0x148] sm:$0xff]
    %v86 = vld [vmem:[#allocation5 + $0x150] sm:$0xff]
    %v87 = vld [vmem:[#allocation5 + $0x158] sm:$0xff]
    %v88 = vld [vmem:[#allocation5 + $0x160] sm:$0xff]
    %v89 = vld [vmem:[#allocation5 + $0x168] sm:$0xff]
    %v90 = vld [vmem:[#allocation5 + $0x170] sm:$0xff]
    %v91 = vld [vmem:[#allocation5 + $0x178] sm:$0xff]
    %v92 = vld [vmem:[#allocation5 + $0x180] sm:$0xff]
    %v93 = vld [vmem:[#allocation5 + $0x188] sm:$0xff]
    %v94 = vld [vmem:[#allocation5 + $0x190] sm:$0xff]
    %v95 = vld [vmem:[#allocation5 + $0x198] sm:$0xff]
    %v96 = vld [vmem:[#allocation5 + $0x1a0] sm:$0xff]
    %v97 = vld [vmem:[#allocation5 + $0x1a8] sm:$0xff]
    %v98 = vld [vmem:[#allocation5 + $0x1b0] sm:$0xff]
    %v99 = vld [vmem:[#allocation5 + $0x1b8] sm:$0xff]
    %v100 = vld [vmem:[#allocation5 + $0x1c0] sm:$0xff]
    %v101 = vld [vmem:[#allocation5 + $0x1c8] sm:$0xff]
    %v102 = vld [vmem:[#allocation5 + $0x1d0] sm:$0xff]
    %v103 = vld [vmem:[#allocation5 + $0x1d8] sm:$0xff]
    %v104 = vld [vmem:[#allocation5 + $0x1e0] sm:$0xff]
    %v105 = vld [vmem:[#allocation5 + $0x1e8] sm:$0xff]
    %v106 = vld [vmem:[#allocation5 + $0x1f0] sm:$0xff]
    %v107 = vld [vmem:[#allocation5 + $0x1f8] sm:$0xff]
    %108 = vmatprep.subr.mxu0 %v105
    %109 = vmatpush1.msra.mxu0 %v104
    %110 = vmatprep.subr.mxu0 %v101
    %111 = vmatpush1.msra.mxu0 %v100
    %112 = vmatprep.subr.mxu0 %v97
    %113 = vmatpush1.msra.mxu0 %v96
    %114 = vmatprep.subr.mxu0 %v93
    %115 = vmatpush1.msra.mxu0 %v92
    %116 = vmatprep.subr.mxu0 %v89
    %117 = vmatpush1.msra.mxu0 %v88
    %118 = vmatprep.subr.mxu0 %v85
    %119 = vmatpush1.msra.mxu0 %v84
    %120 = vmatprep.subr.mxu0 %v81
    %121 = vmatpush1.msra.mxu0 %v80
    %122 = vmatprep.subr.mxu0 %v77
    %123 = vmatpush1.msra.mxu0 %v76
    %124 = vmatprep.subr.mxu0 %v73
    %125 = vmatpush1.msra.mxu0 %v72
    %126 = vmatprep.subr.mxu0 %v69
    %127 = vmatpush1.msra.mxu0 %v68
    %128 = vmatprep.subr.mxu0 %v65
    %129 = vmatpush1.msra.mxu0 %v64
    %130 = vmatprep.subr.mxu0 %v61
    %131 = vmatpush1.msra.mxu0 %v60
    %132 = vmatprep.subr.mxu0 %v57
    %133 = vmatpush1.msra.mxu0 %v56
    %134 = vmatprep.subr.mxu0 %v53
    %135 = vmatpush1.msra.mxu0 %v52
    %136 = vmatprep.subr.mxu0 %v49
    %137 = vmatpush1.msra.mxu0 %v48
    %138 = vmatprep.subr.mxu0 %v45
    %139 = vmatpush1.msra.mxu0 %v44
    %140 = vmatprep.subr.mxu0 0.0
    %141 = vmatpush2.msra.mxu0 0.0
    %142 = vmatprep.subr.mxu0 0.0
    %143 = vmatpush2.msra.mxu0 0.0
    %144 = vmatprep.subr.mxu0 0.0
    %145 = vmatpush2.msra.mxu0 0.0
    %146 = vmatprep.subr.mxu0 0.0
    %147 = vmatpush2.msra.mxu0 0.0
    %148 = vmatprep.subr.mxu0 0.0
    %149 = vmatpush2.msra.mxu0 0.0
    %150 = vmatprep.subr.mxu0 0.0
    %151 = vmatpush2.msra.mxu0 0.0
    %152 = vmatprep.subr.mxu0 0.0
    %153 = vmatpush2.msra.mxu0 0.0
    %154 = vmatprep.subr.mxu0 0.0
    %155 = vmatpush2.msra.mxu0 0.0
    %156 = vmatprep.subr.mxu0 0.0
    %157 = vmatpush2.msra.mxu0 0.0
    %158 = vmatprep.subr.mxu0 0.0
    %159 = vmatpush2.msra.mxu0 0.0
    %160 = vmatprep.subr.mxu0 0.0
    %161 = vmatpush2.msra.mxu0 0.0
    %162 = vmatprep.subr.mxu0 0.0
    %163 = vmatpush2.msra.mxu0 0.0
    %164 = vmatprep.subr.mxu0 0.0
    %165 = vmatpush2.msra.mxu0 0.0
    %166 = vmatprep.subr.mxu0 0.0
    %167 = vmatpush2.msra.mxu0 0.0
    %168 = vmatprep.subr.mxu0 0.0
    %169 = vmatpush2.msra.mxu0 0.0
    %170 = vmatprep.subr.mxu0 0.0
    %171 = vmatpush2.msra.mxu0 0.0
    %172 = vmatprep.mubr.f32.mxu0 0.0
    %173 = vmatmul.mubr.f32.gmra.mxu0 0.0
    %v174 = vpop.f32.mrf.mxu0
    %v175 = vadd.f32 0.0, %v174
    %v176 = vpop.f32.mrf.mxu0
    %v177 = vadd.f32 0.0, %v176
    %178 = vdwg.mxu0
    %179 = vmatprep.subr.mxu0 %v107
    %180 = vmatpush1.msra.mxu0 %v106
    %181 = vmatprep.subr.mxu0 %v103
    %182 = vmatpush1.msra.mxu0 %v102
    %183 = vmatprep.subr.mxu0 %v99
    %184 = vmatpush1.msra.mxu0 %v98
    %185 = vmatprep.subr.mxu0 %v95
    %186 = vmatpush1.msra.mxu0 %v94
    %187 = vmatprep.subr.mxu0 %v91
    %188 = vmatpush1.msra.mxu0 %v90
    %189 = vmatprep.subr.mxu0 %v87
    %190 = vmatpush1.msra.mxu0 %v86
    %191 = vmatprep.subr.mxu0 %v83
    %192 = vmatpush1.msra.mxu0 %v82
    %193 = vmatprep.subr.mxu0 %v79
    %194 = vmatpush1.msra.mxu0 %v78
    %195 = vmatprep.subr.mxu0 %v75
    %196 = vmatpush1.msra.mxu0 %v74
    %197 = vmatprep.subr.mxu0 %v71
    %198 = vmatpush1.msra.mxu0 %v70
    %199 = vmatprep.subr.mxu0 %v67
    %200 = vmatpush1.msra.mxu0 %v66
    %201 = vmatprep.subr.mxu0 %v63
    %202 = vmatpush1.msra.mxu0 %v62
    %203 = vmatprep.subr.mxu0 %v59
    %204 = vmatpush1.msra.mxu0 %v58
    %205 = vmatprep.subr.mxu0 %v55
    %206 = vmatpush1.msra.mxu0 %v54
    %207 = vmatprep.subr.mxu0 %v51
    %208 = vmatpush1.msra.mxu0 %v50
    %209 = vmatprep.subr.mxu0 %v47
    %210 = vmatpush1.msra.mxu0 %v46
    %211 = vmatprep.subr.mxu0 0.0
    %212 = vmatpush2.msra.mxu0 0.0
    %213 = vmatprep.subr.mxu0 0.0
    %214 = vmatpush2.msra.mxu0 0.0
    %215 = vmatprep.subr.mxu0 0.0
    %216 = vmatpush2.msra.mxu0 0.0
    %217 = vmatprep.subr.mxu0 0.0
    %218 = vmatpush2.msra.mxu0 0.0
    %219 = vmatprep.subr.mxu0 0.0
    %220 = vmatpush2.msra.mxu0 0.0
    %221 = vmatprep.subr.mxu0 0.0
    %222 = vmatpush2.msra.mxu0 0.0
    %223 = vmatprep.subr.mxu0 0.0
    %224 = vmatpush2.msra.mxu0 0.0
    %225 = vmatprep.subr.mxu0 0.0
    %226 = vmatpush2.msra.mxu0 0.0
    %227 = vmatprep.subr.mxu0 0.0
    %228 = vmatpush2.msra.mxu0 0.0
    %229 = vmatprep.subr.mxu0 0.0
    %230 = vmatpush2.msra.mxu0 0.0
    %231 = vmatprep.subr.mxu0 0.0
    %232 = vmatpush2.msra.mxu0 0.0
    %233 = vmatprep.subr.mxu0 0.0
    %234 = vmatpush2.msra.mxu0 0.0
    %235 = vmatprep.subr.mxu0 0.0
    %236 = vmatpush2.msra.mxu0 0.0
    %237 = vmatprep.subr.mxu0 0.0
    %238 = vmatpush2.msra.mxu0 0.0
    %239 = vmatprep.subr.mxu0 0.0
    %240 = vmatpush2.msra.mxu0 0.0
    %241 = vmatprep.subr.mxu0 0.0
    %242 = vmatpush2.msra.mxu0 0.0
    %243 = vmatprep.mubr.f32.mxu0 0.0
    %244 = vmatmul.mubr.f32.gmra.mxu0 0.0
    %v245 = vpop.f32.mrf.mxu0
    %v246 = vadd.f32 0.0, %v245
    %v247 = vpop.f32.mrf.mxu0
    %v248 = vadd.f32 0.0, %v247
    %249 = vdwg.mxu0
    %v250 = vadd.f32 %v40, %v175
    %v251 = vadd.f32 %v41, %v177
    %v252 = vadd.f32 %v42, %v246
    %v253 = vadd.f32 %v43, %v248
    %v254 = vxor.u32 %v250, 2147483648
    %v255 = vxor.u32 %v251, 2147483648
    %v256 = vxor.u32 %v252, 2147483648
    %v257 = vmul.f32 %v254, 1.442695
    %v258 = vpow.pop %v257
    %v259 = vmul.f32 %v255, 1.442695
    %v260 = vpow.pop %v259
    %v261 = vmul.f32 %v256, 1.442695
    %v262 = vpow.pop %v261
    %v263 = vadd.f32 %v258, 1.0
    %v264 = vadd.f32 %v260, 1.0
    %v265 = vadd.f32 %v262, 1.0
    %v266 = vrcp.pop %v263
    %v267 = vmul.f32 1.0, %v266
    %v268 = vrcp.pop %v264
    %v269 = vmul.f32 1.0, %v268
    %v270 = vrcp.pop %v265
    %v271 = vmul.f32 1.0, %v270
    %v272 = vtanh.pop %v253
    %v273 = vmul.f32 %v269, 0.0
    %v274 = vmul.f32 %v267, %v272
    %v275 = vadd.f32 %v273, %v274
    %v276 = vtanh.pop %v275
    %v277 = vmul.f32 %v271, %v276
    %s278 = scalar_lea.vmem [#allocation2], 32
    %v279 = vld [vmem:[%s278] sm:$0xff]
    %v280 = vld [vmem:[%s278 + $0x8] sm:$0xff]
    %v281 = vld [vmem:[%s278 + $0x10] sm:$0xff]
    %v282 = vld [vmem:[%s278 + $0x18] sm:$0xff]
    %283 = vmatprep.subr.mxu0 %v105
    %284 = vmatpush1.msra.mxu0 %v104
    %285 = vmatprep.subr.mxu0 %v101
    %286 = vmatpush1.msra.mxu0 %v100
    %287 = vmatprep.subr.mxu0 %v97
    %288 = vmatpush1.msra.mxu0 %v96
    %289 = vmatprep.subr.mxu0 %v93
    %290 = vmatpush1.msra.mxu0 %v92
    %291 = vmatprep.subr.mxu0 %v89
    %292 = vmatpush1.msra.mxu0 %v88
    %293 = vmatprep.subr.mxu0 %v85
    %294 = vmatpush1.msra.mxu0 %v84
    %295 = vmatprep.subr.mxu0 %v81
    %296 = vmatpush1.msra.mxu0 %v80
    %297 = vmatprep.subr.mxu0 %v77
    %298 = vmatpush1.msra.mxu0 %v76
    %299 = vmatprep.subr.mxu0 %v73
    %300 = vmatpush1.msra.mxu0 %v72
    %301 = vmatprep.subr.mxu0 %v69
    %302 = vmatpush1.msra.mxu0 %v68
    %303 = vmatprep.subr.mxu0 %v65
    %304 = vmatpush1.msra.mxu0 %v64
    %305 = vmatprep.subr.mxu0 %v61
    %306 = vmatpush1.msra.mxu0 %v60
    %307 = vmatprep.subr.mxu0 %v57
    %308 = vmatpush1.msra.mxu0 %v56
    %309 = vmatprep.subr.mxu0 %v53
    %310 = vmatpush1.msra.mxu0 %v52
    %311 = vmatprep.subr.mxu0 %v49
    %312 = vmatpush1.msra.mxu0 %v48
    %313 = vmatprep.subr.mxu0 %v45
    %314 = vmatpush1.msra.mxu0 %v44
    %315 = vmatprep.subr.mxu0 0.0
    %316 = vmatpush2.msra.mxu0 0.0
    %317 = vmatprep.subr.mxu0 0.0
    %318 = vmatpush2.msra.mxu0 0.0
    %319 = vmatprep.subr.mxu0 0.0
    %320 = vmatpush2.msra.mxu0 0.0
    %321 = vmatprep.subr.mxu0 0.0
    %322 = vmatpush2.msra.mxu0 0.0
    %323 = vmatprep.subr.mxu0 0.0
    %324 = vmatpush2.msra.mxu0 0.0
    %325 = vmatprep.subr.mxu0 0.0
    %326 = vmatpush2.msra.mxu0 0.0
    %327 = vmatprep.subr.mxu0 0.0
    %328 = vmatpush2.msra.mxu0 0.0
    %329 = vmatprep.subr.mxu0 0.0
    %330 = vmatpush2.msra.mxu0 0.0
    %331 = vmatprep.subr.mxu0 0.0
    %332 = vmatpush2.msra.mxu0 0.0
    %333 = vmatprep.subr.mxu0 0.0
    %334 = vmatpush2.msra.mxu0 0.0
    %335 = vmatprep.subr.mxu0 0.0
    %336 = vmatpush2.msra.mxu0 0.0
    %337 = vmatprep.subr.mxu0 0.0
    %338 = vmatpush2.msra.mxu0 0.0
    %339 = vmatprep.subr.mxu0 0.0
    %340 = vmatpush2.msra.mxu0 0.0
    %341 = vmatprep.subr.mxu0 0.0
    %342 = vmatpush2.msra.mxu0 0.0
    %343 = vmatprep.subr.mxu0 0.0
    %344 = vmatpush2.msra.mxu0 0.0
    %345 = vmatprep.subr.mxu0 0.0
    %346 = vmatpush2.msra.mxu0 0.0
    %347 = vmatprep.mubr.f32.mxu0 0.0
    %348 = vmatmul.mubr.f32.gmra.mxu0 %v277
    %v349 = vpop.f32.mrf.mxu0
    %v350 = vadd.f32 0.0, %v349
    %v351 = vpop.f32.mrf.mxu0
    %v352 = vadd.f32 0.0, %v351
    %353 = vdwg.mxu0
    %354 = vmatprep.subr.mxu0 %v107
    %355 = vmatpush1.msra.mxu0 %v106
    %356 = vmatprep.subr.mxu0 %v103
    %357 = vmatpush1.msra.mxu0 %v102
    %358 = vmatprep.subr.mxu0 %v99
    %359 = vmatpush1.msra.mxu0 %v98
    %360 = vmatprep.subr.mxu0 %v95
    %361 = vmatpush1.msra.mxu0 %v94
    %362 = vmatprep.subr.mxu0 %v91
    %363 = vmatpush1.msra.mxu0 %v90
    %364 = vmatprep.subr.mxu0 %v87
    %365 = vmatpush1.msra.mxu0 %v86
    %366 = vmatprep.subr.mxu0 %v83
    %367 = vmatpush1.msra.mxu0 %v82
    %368 = vmatprep.subr.mxu0 %v79
    %369 = vmatpush1.msra.mxu0 %v78
    %370 = vmatprep.subr.mxu0 %v75
    %371 = vmatpush1.msra.mxu0 %v74
    %372 = vmatprep.subr.mxu0 %v71
    %373 = vmatpush1.msra.mxu0 %v70
    %374 = vmatprep.subr.mxu0 %v67
    %375 = vmatpush1.msra.mxu0 %v66
    %376 = vmatprep.subr.mxu0 %v63
    %377 = vmatpush1.msra.mxu0 %v62
    %378 = vmatprep.subr.mxu0 %v59
    %379 = vmatpush1.msra.mxu0 %v58
    %380 = vmatprep.subr.mxu0 %v55
    %381 = vmatpush1.msra.mxu0 %v54
    %382 = vmatprep.subr.mxu0 %v51
    %383 = vmatpush1.msra.mxu0 %v50
    %384 = vmatprep.subr.mxu0 %v47
    %385 = vmatpush1.msra.mxu0 %v46
    %386 = vmatprep.subr.mxu0 0.0
    %387 = vmatpush2.msra.mxu0 0.0
    %388 = vmatprep.subr.mxu0 0.0
    %389 = vmatpush2.msra.mxu0 0.0
    %390 = vmatprep.subr.mxu0 0.0
    %391 = vmatpush2.msra.mxu0 0.0
    %392 = vmatprep.subr.mxu0 0.0
    %393 = vmatpush2.msra.mxu0 0.0
    %394 = vmatprep.subr.mxu0 0.0
    %395 = vmatpush2.msra.mxu0 0.0
    %396 = vmatprep.subr.mxu0 0.0
    %397 = vmatpush2.msra.mxu0 0.0
    %398 = vmatprep.subr.mxu0 0.0
    %399 = vmatpush2.msra.mxu0 0.0
    %400 = vmatprep.subr.mxu0 0.0
    %401 = vmatpush2.msra.mxu0 0.0
    %402 = vmatprep.subr.mxu0 0.0
    %403 = vmatpush2.msra.mxu0 0.0
    %404 = vmatprep.subr.mxu0 0.0
    %405 = vmatpush2.msra.mxu0 0.0
    %406 = vmatprep.subr.mxu0 0.0
    %407 = vmatpush2.msra.mxu0 0.0
    %408 = vmatprep.subr.mxu0 0.0
    %409 = vmatpush2.msra.mxu0 0.0
    %410 = vmatprep.subr.mxu0 0.0
    %411 = vmatpush2.msra.mxu0 0.0
    %412 = vmatprep.subr.mxu0 0.0
    %413 = vmatpush2.msra.mxu0 0.0
    %414 = vmatprep.subr.mxu0 0.0
    %415 = vmatpush2.msra.mxu0 0.0
    %416 = vmatprep.subr.mxu0 0.0
    %417 = vmatpush2.msra.mxu0 0.0
    %418 = vmatprep.mubr.f32.mxu0 0.0
    %419 = vmatmul.mubr.f32.gmra.mxu0 %v277
    %v420 = vpop.f32.mrf.mxu0
    %v421 = vadd.f32 0.0, %v420
    %v422 = vpop.f32.mrf.mxu0
    %v423 = vadd.f32 0.0, %v422
    %424 = vdwg.mxu0
    %v425 = vadd.f32 %v279, %v350
    %v426 = vadd.f32 %v280, %v352
    %v427 = vadd.f32 %v281, %v421
    %v428 = vadd.f32 %v282, %v423
    %v429 = vxor.u32 %v425, 2147483648
    %v430 = vxor.u32 %v426, 2147483648
    %v431 = vxor.u32 %v427, 2147483648
    %v432 = vmul.f32 %v429, 1.442695
    %v433 = vpow.pop %v432
    %v434 = vmul.f32 %v430, 1.442695
    %v435 = vpow.pop %v434
    %v436 = vmul.f32 %v431, 1.442695
    %v437 = vpow.pop %v436
    %v438 = vadd.f32 %v433, 1.0
    %v439 = vadd.f32 %v435, 1.0
    %v440 = vadd.f32 %v437, 1.0
    %v441 = vrcp.pop %v438
    %v442 = vmul.f32 1.0, %v441
    %v443 = vrcp.pop %v439
    %v444 = vmul.f32 1.0, %v443
    %v445 = vrcp.pop %v440
    %v446 = vmul.f32 1.0, %v445
    %v447 = vtanh.pop %v428
    %v448 = vmul.f32 %v444, %v275
    %v449 = vmul.f32 %v442, %v447
    %v450 = vadd.f32 %v448, %v449
    %v451 = vtanh.pop %v450
    %v452 = vmul.f32 %v446, %v451
    %s453 = scalar_lea.vmem [#allocation2], 64
    %v454 = vld [vmem:[%s453] sm:$0xff]
    %v455 = vld [vmem:[%s453 + $0x8] sm:$0xff]
    %v456 = vld [vmem:[%s453 + $0x10] sm:$0xff]
    %v457 = vld [vmem:[%s453 + $0x18] sm:$0xff]
    %458 = vmatprep.subr.mxu0 %v105
    %459 = vmatpush1.msra.mxu0 %v104
    %460 = vmatprep.subr.mxu0 %v101
    %461 = vmatpush1.msra.mxu0 %v100
    %462 = vmatprep.subr.mxu0 %v97
    %463 = vmatpush1.msra.mxu0 %v96
    %464 = vmatprep.subr.mxu0 %v93
    %465 = vmatpush1.msra.mxu0 %v92
    %466 = vmatprep.subr.mxu0 %v89
    %467 = vmatpush1.msra.mxu0 %v88
    %468 = vmatprep.subr.mxu0 %v85
    %469 = vmatpush1.msra.mxu0 %v84
    %470 = vmatprep.subr.mxu0 %v81
    %471 = vmatpush1.msra.mxu0 %v80
    %472 = vmatprep.subr.mxu0 %v77
    %473 = vmatpush1.msra.mxu0 %v76
    %474 = vmatprep.subr.mxu0 %v73
    %475 = vmatpush1.msra.mxu0 %v72
    %476 = vmatprep.subr.mxu0 %v69
    %477 = vmatpush1.msra.mxu0 %v68
    %478 = vmatprep.subr.mxu0 %v65
    %479 = vmatpush1.msra.mxu0 %v64
    %480 = vmatprep.subr.mxu0 %v61
    %481 = vmatpush1.msra.mxu0 %v60
    %482 = vmatprep.subr.mxu0 %v57
    %483 = vmatpush1.msra.mxu0 %v56
    %484 = vmatprep.subr.mxu0 %v53
    %485 = vmatpush1.msra.mxu0 %v52
    %486 = vmatprep.subr.mxu0 %v49
    %487 = vmatpush1.msra.mxu0 %v48
    %488 = vmatprep.subr.mxu0 %v45
    %489 = vmatpush1.msra.mxu0 %v44
    %490 = vmatprep.subr.mxu0 0.0
    %491 = vmatpush2.msra.mxu0 0.0
    %492 = vmatprep.subr.mxu0 0.0
    %493 = vmatpush2.msra.mxu0 0.0
    %494 = vmatprep.subr.mxu0 0.0
    %495 = vmatpush2.msra.mxu0 0.0
    %496 = vmatprep.subr.mxu0 0.0
    %497 = vmatpush2.msra.mxu0 0.0
    %498 = vmatprep.subr.mxu0 0.0
    %499 = vmatpush2.msra.mxu0 0.0
    %500 = vmatprep.subr.mxu0 0.0
    %501 = vmatpush2.msra.mxu0 0.0
    %502 = vmatprep.subr.mxu0 0.0
    %503 = vmatpush2.msra.mxu0 0.0
    %504 = vmatprep.subr.mxu0 0.0
    %505 = vmatpush2.msra.mxu0 0.0
    %506 = vmatprep.subr.mxu0 0.0
    %507 = vmatpush2.msra.mxu0 0.0
    %508 = vmatprep.subr.mxu0 0.0
    %509 = vmatpush2.msra.mxu0 0.0
    %510 = vmatprep.subr.mxu0 0.0
    %511 = vmatpush2.msra.mxu0 0.0
    %512 = vmatprep.subr.mxu0 0.0
    %513 = vmatpush2.msra.mxu0 0.0
    %514 = vmatprep.subr.mxu0 0.0
    %515 = vmatpush2.msra.mxu0 0.0
    %516 = vmatprep.subr.mxu0 0.0
    %517 = vmatpush2.msra.mxu0 0.0
    %518 = vmatprep.subr.mxu0 0.0
    %519 = vmatpush2.msra.mxu0 0.0
    %520 = vmatprep.subr.mxu0 0.0
    %521 = vmatpush2.msra.mxu0 0.0
    %522 = vmatprep.mubr.f32.mxu0 0.0
    %523 = vmatmul.mubr.f32.gmra.mxu0 %v452
    %v524 = vpop.f32.mrf.mxu0
    %v525 = vadd.f32 0.0, %v524
    %v526 = vpop.f32.mrf.mxu0
    %v527 = vadd.f32 0.0, %v526
    %528 = vdwg.mxu0
    %529 = vmatprep.subr.mxu0 %v107
    %530 = vmatpush1.msra.mxu0 %v106
    %531 = vmatprep.subr.mxu0 %v103
    %532 = vmatpush1.msra.mxu0 %v102
    %533 = vmatprep.subr.mxu0 %v99
    %534 = vmatpush1.msra.mxu0 %v98
    %535 = vmatprep.subr.mxu0 %v95
    %536 = vmatpush1.msra.mxu0 %v94
    %537 = vmatprep.subr.mxu0 %v91
    %538 = vmatpush1.msra.mxu0 %v90
    %539 = vmatprep.subr.mxu0 %v87
    %540 = vmatpush1.msra.mxu0 %v86
    %541 = vmatprep.subr.mxu0 %v83
    %542 = vmatpush1.msra.mxu0 %v82
    %543 = vmatprep.subr.mxu0 %v79
    %544 = vmatpush1.msra.mxu0 %v78
    %545 = vmatprep.subr.mxu0 %v75
    %546 = vmatpush1.msra.mxu0 %v74
    %547 = vmatprep.subr.mxu0 %v71
    %548 = vmatpush1.msra.mxu0 %v70
    %549 = vmatprep.subr.mxu0 %v67
    %550 = vmatpush1.msra.mxu0 %v66
    %551 = vmatprep.subr.mxu0 %v63
    %552 = vmatpush1.msra.mxu0 %v62
    %553 = vmatprep.subr.mxu0 %v59
    %554 = vmatpush1.msra.mxu0 %v58
    %555 = vmatprep.subr.mxu0 %v55
    %556 = vmatpush1.msra.mxu0 %v54
    %557 = vmatprep.subr.mxu0 %v51
    %558 = vmatpush1.msra.mxu0 %v50
    %559 = vmatprep.subr.mxu0 %v47
    %560 = vmatpush1.msra.mxu0 %v46
    %561 = vmatprep.subr.mxu0 0.0
    %562 = vmatpush2.msra.mxu0 0.0
    %563 = vmatprep.subr.mxu0 0.0
    %564 = vmatpush2.msra.mxu0 0.0
    %565 = vmatprep.subr.mxu0 0.0
    %566 = vmatpush2.msra.mxu0 0.0
    %567 = vmatprep.subr.mxu0 0.0
    %568 = vmatpush2.msra.mxu0 0.0
    %569 = vmatprep.subr.mxu0 0.0
    %570 = vmatpush2.msra.mxu0 0.0
    %571 = vmatprep.subr.mxu0 0.0
    %572 = vmatpush2.msra.mxu0 0.0
    %573 = vmatprep.subr.mxu0 0.0
    %574 = vmatpush2.msra.mxu0 0.0
    %575 = vmatprep.subr.mxu0 0.0
    %576 = vmatpush2.msra.mxu0 0.0
    %577 = vmatprep.subr.mxu0 0.0
    %578 = vmatpush2.msra.mxu0 0.0
    %579 = vmatprep.subr.mxu0 0.0
    %580 = vmatpush2.msra.mxu0 0.0
    %581 = vmatprep.subr.mxu0 0.0
    %582 = vmatpush2.msra.mxu0 0.0
    %583 = vmatprep.subr.mxu0 0.0
    %584 = vmatpush2.msra.mxu0 0.0
    %585 = vmatprep.subr.mxu0 0.0
    %586 = vmatpush2.msra.mxu0 0.0
    %587 = vmatprep.subr.mxu0 0.0
    %588 = vmatpush2.msra.mxu0 0.0
    %589 = vmatprep.subr.mxu0 0.0
    %590 = vmatpush2.msra.mxu0 0.0
    %591 = vmatprep.subr.mxu0 0.0
    %592 = vmatpush2.msra.mxu0 0.0
    %593 = vmatprep.mubr.f32.mxu0 0.0
    %594 = vmatmul.mubr.f32.gmra.mxu0 %v452
    %v595 = vpop.f32.mrf.mxu0
    %v596 = vadd.f32 0.0, %v595
    %v597 = vpop.f32.mrf.mxu0
    %v598 = vadd.f32 0.0, %v597
    %599 = vdwg.mxu0
    %v600 = vadd.f32 %v454, %v525
    %v601 = vadd.f32 %v455, %v527
    %v602 = vadd.f32 %v456, %v596
    %v603 = vadd.f32 %v457, %v598
    %v604 = vxor.u32 %v600, 2147483648
    %v605 = vxor.u32 %v601, 2147483648
    %v606 = vxor.u32 %v602, 2147483648
    %v607 = vmul.f32 %v604, 1.442695
    %v608 = vpow.pop %v607
    %v609 = vmul.f32 %v605, 1.442695
    %v610 = vpow.pop %v609
    %v611 = vmul.f32 %v606, 1.442695
    %v612 = vpow.pop %v611
    %v613 = vadd.f32 %v608, 1.0
    %v614 = vadd.f32 %v610, 1.0
    %v615 = vadd.f32 %v612, 1.0
    %v616 = vrcp.pop %v613
    %v617 = vmul.f32 1.0, %v616
    %v618 = vrcp.pop %v614
    %v619 = vmul.f32 1.0, %v618
    %v620 = vrcp.pop %v615
    %v621 = vmul.f32 1.0, %v620
    %v622 = vtanh.pop %v603
    %v623 = vmul.f32 %v619, %v450
    %v624 = vmul.f32 %v617, %v622
    %v625 = vadd.f32 %v623, %v624
    %v626 = vtanh.pop %v625
    %v627 = vmul.f32 %v621, %v626
    %s628 = scalar_lea.vmem [#allocation2], 96
    %v629 = vld [vmem:[%s628] sm:$0xff]
    %v630 = vld [vmem:[%s628 + $0x8] sm:$0xff]
    %v631 = vld [vmem:[%s628 + $0x10] sm:$0xff]
    %v632 = vld [vmem:[%s628 + $0x18] sm:$0xff]
    %633 = vmatprep.subr.mxu0 %v105
    %634 = vmatpush1.msra.mxu0 %v104
    %635 = vmatprep.subr.mxu0 %v101
    %636 = vmatpush1.msra.mxu0 %v100
    %637 = vmatprep.subr.mxu0 %v97
    %638 = vmatpush1.msra.mxu0 %v96
    %639 = vmatprep.subr.mxu0 %v93
    %640 = vmatpush1.msra.mxu0 %v92
    %641 = vmatprep.subr.mxu0 %v89
    %642 = vmatpush1.msra.mxu0 %v88
    %643 = vmatprep.subr.mxu0 %v85
    %644 = vmatpush1.msra.mxu0 %v84
    %645 = vmatprep.subr.mxu0 %v81
    %646 = vmatpush1.msra.mxu0 %v80
    %647 = vmatprep.subr.mxu0 %v77
    %648 = vmatpush1.msra.mxu0 %v76
    %649 = vmatprep.subr.mxu0 %v73
    %650 = vmatpush1.msra.mxu0 %v72
    %651 = vmatprep.subr.mxu0 %v69
    %652 = vmatpush1.msra.mxu0 %v68
    %653 = vmatprep.subr.mxu0 %v65
    %654 = vmatpush1.msra.mxu0 %v64
    %655 = vmatprep.subr.mxu0 %v61
    %656 = vmatpush1.msra.mxu0 %v60
    %657 = vmatprep.subr.mxu0 %v57
    %658 = vmatpush1.msra.mxu0 %v56
    %659 = vmatprep.subr.mxu0 %v53
    %660 = vmatpush1.msra.mxu0 %v52
    %661 = vmatprep.subr.mxu0 %v49
    %662 = vmatpush1.msra.mxu0 %v48
    %663 = vmatprep.subr.mxu0 %v45
    %664 = vmatpush1.msra.mxu0 %v44
    %665 = vmatprep.subr.mxu0 0.0
    %666 = vmatpush2.msra.mxu0 0.0
    %667 = vmatprep.subr.mxu0 0.0
    %668 = vmatpush2.msra.mxu0 0.0
    %669 = vmatprep.subr.mxu0 0.0
    %670 = vmatpush2.msra.mxu0 0.0
    %671 = vmatprep.subr.mxu0 0.0
    %672 = vmatpush2.msra.mxu0 0.0
    %673 = vmatprep.subr.mxu0 0.0
    %674 = vmatpush2.msra.mxu0 0.0
    %675 = vmatprep.subr.mxu0 0.0
    %676 = vmatpush2.msra.mxu0 0.0
    %677 = vmatprep.subr.mxu0 0.0
    %678 = vmatpush2.msra.mxu0 0.0
    %679 = vmatprep.subr.mxu0 0.0
    %680 = vmatpush2.msra.mxu0 0.0
    %681 = vmatprep.subr.mxu0 0.0
    %682 = vmatpush2.msra.mxu0 0.0
    %683 = vmatprep.subr.mxu0 0.0
    %684 = vmatpush2.msra.mxu0 0.0
    %685 = vmatprep.subr.mxu0 0.0
    %686 = vmatpush2.msra.mxu0 0.0
    %687 = vmatprep.subr.mxu0 0.0
    %688 = vmatpush2.msra.mxu0 0.0
    %689 = vmatprep.subr.mxu0 0.0
    %690 = vmatpush2.msra.mxu0 0.0
    %691 = vmatprep.subr.mxu0 0.0
    %692 = vmatpush2.msra.mxu0 0.0
    %693 = vmatprep.subr.mxu0 0.0
    %694 = vmatpush2.msra.mxu0 0.0
    %695 = vmatprep.subr.mxu0 0.0
    %696 = vmatpush2.msra.mxu0 0.0
    %697 = vmatprep.mubr.f32.mxu0 0.0
    %698 = vmatmul.mubr.f32.gmra.mxu0 %v627
    %v699 = vpop.f32.mrf.mxu0
    %v700 = vadd.f32 0.0, %v699
    %v701 = vpop.f32.mrf.mxu0
    %v702 = vadd.f32 0.0, %v701
    %703 = vdwg.mxu0
    %704 = vmatprep.subr.mxu0 %v107
    %705 = vmatpush1.msra.mxu0 %v106
    %706 = vmatprep.subr.mxu0 %v103
    %707 = vmatpush1.msra.mxu0 %v102
    %708 = vmatprep.subr.mxu0 %v99
    %709 = vmatpush1.msra.mxu0 %v98
    %710 = vmatprep.subr.mxu0 %v95
    %711 = vmatpush1.msra.mxu0 %v94
    %712 = vmatprep.subr.mxu0 %v91
    %713 = vmatpush1.msra.mxu0 %v90
    %714 = vmatprep.subr.mxu0 %v87
    %715 = vmatpush1.msra.mxu0 %v86
    %716 = vmatprep.subr.mxu0 %v83
    %717 = vmatpush1.msra.mxu0 %v82
    %718 = vmatprep.subr.mxu0 %v79
    %719 = vmatpush1.msra.mxu0 %v78
    %720 = vmatprep.subr.mxu0 %v75
    %721 = vmatpush1.msra.mxu0 %v74
    %722 = vmatprep.subr.mxu0 %v71
    %723 = vmatpush1.msra.mxu0 %v70
    %724 = vmatprep.subr.mxu0 %v67
    %725 = vmatpush1.msra.mxu0 %v66
    %726 = vmatprep.subr.mxu0 %v63
    %727 = vmatpush1.msra.mxu0 %v62
    %728 = vmatprep.subr.mxu0 %v59
    %729 = vmatpush1.msra.mxu0 %v58
    %730 = vmatprep.subr.mxu0 %v55
    %731 = vmatpush1.msra.mxu0 %v54
    %732 = vmatprep.subr.mxu0 %v51
    %733 = vmatpush1.msra.mxu0 %v50
    %734 = vmatprep.subr.mxu0 %v47
    %735 = vmatpush1.msra.mxu0 %v46
    %736 = vmatprep.subr.mxu0 0.0
    %737 = vmatpush2.msra.mxu0 0.0
    %738 = vmatprep.subr.mxu0 0.0
    %739 = vmatpush2.msra.mxu0 0.0
    %740 = vmatprep.subr.mxu0 0.0
    %741 = vmatpush2.msra.mxu0 0.0
    %742 = vmatprep.subr.mxu0 0.0
    %743 = vmatpush2.msra.mxu0 0.0
    %744 = vmatprep.subr.mxu0 0.0
    %745 = vmatpush2.msra.mxu0 0.0
    %746 = vmatprep.subr.mxu0 0.0
    %747 = vmatpush2.msra.mxu0 0.0
    %748 = vmatprep.subr.mxu0 0.0
    %749 = vmatpush2.msra.mxu0 0.0
    %750 = vmatprep.subr.mxu0 0.0
    %751 = vmatpush2.msra.mxu0 0.0
    %752 = vmatprep.subr.mxu0 0.0
    %753 = vmatpush2.msra.mxu0 0.0
    %754 = vmatprep.subr.mxu0 0.0
    %755 = vmatpush2.msra.mxu0 0.0
    %756 = vmatprep.subr.mxu0 0.0
    %757 = vmatpush2.msra.mxu0 0.0
    %758 = vmatprep.subr.mxu0 0.0
    %759 = vmatpush2.msra.mxu0 0.0
    %760 = vmatprep.subr.mxu0 0.0
    %761 = vmatpush2.msra.mxu0 0.0
    %762 = vmatprep.subr.mxu0 0.0
    %763 = vmatpush2.msra.mxu0 0.0
    %764 = vmatprep.subr.mxu0 0.0
    %765 = vmatpush2.msra.mxu0 0.0
    %766 = vmatprep.subr.mxu0 0.0
    %767 = vmatpush2.msra.mxu0 0.0
    %768 = vmatprep.mubr.f32.mxu0 0.0
    %769 = vmatmul.mubr.f32.gmra.mxu0 %v627
    %v770 = vpop.f32.mrf.mxu0
    %v771 = vadd.f32 0.0, %v770
    %v772 = vpop.f32.mrf.mxu0
    %v773 = vadd.f32 0.0, %v772
    %774 = vdwg.mxu0
    %v775 = vadd.f32 %v629, %v700
    %v776 = vadd.f32 %v630, %v702
    %v777 = vadd.f32 %v631, %v771
    %v778 = vadd.f32 %v632, %v773
    %v779 = vxor.u32 %v775, 2147483648
    %v780 = vxor.u32 %v776, 2147483648
    %v781 = vxor.u32 %v777, 2147483648
    %v782 = vmul.f32 %v779, 1.442695
    %v783 = vpow.pop %v782
    %v784 = vmul.f32 %v780, 1.442695
    %v785 = vpow.pop %v784
    %v786 = vmul.f32 %v781, 1.442695
    %v787 = vpow.pop %v786
    %v788 = vadd.f32 %v783, 1.0
    %v789 = vadd.f32 %v785, 1.0
    %v790 = vadd.f32 %v787, 1.0
    %v791 = vrcp.pop %v788
    %v792 = vmul.f32 1.0, %v791
    %v793 = vrcp.pop %v789
    %v794 = vmul.f32 1.0, %v793
    %v795 = vrcp.pop %v790
    %v796 = vmul.f32 1.0, %v795
    %v797 = vtanh.pop %v778
    %v798 = vmul.f32 %v794, %v625
    %v799 = vmul.f32 %v792, %v797
    %v800 = vadd.f32 %v798, %v799
    %v801 = vtanh.pop %v800
    %v802 = vmul.f32 %v796, %v801
    %s803 = scalar_lea.vmem [#allocation2], 128
    %v804 = vld [vmem:[%s803] sm:$0xff]
    %v805 = vld [vmem:[%s803 + $0x8] sm:$0xff]
    %v806 = vld [vmem:[%s803 + $0x10] sm:$0xff]
    %v807 = vld [vmem:[%s803 + $0x18] sm:$0xff]
    %808 = vmatprep.subr.mxu0 %v105
    %809 = vmatpush1.msra.mxu0 %v104
    %810 = vmatprep.subr.mxu0 %v101
    %811 = vmatpush1.msra.mxu0 %v100
    %812 = vmatprep.subr.mxu0 %v97
    %813 = vmatpush1.msra.mxu0 %v96
    %814 = vmatprep.subr.mxu0 %v93
    %815 = vmatpush1.msra.mxu0 %v92
    %816 = vmatprep.subr.mxu0 %v89
    %817 = vmatpush1.msra.mxu0 %v88
    %818 = vmatprep.subr.mxu0 %v85
    %819 = vmatpush1.msra.mxu0 %v84
    %820 = vmatprep.subr.mxu0 %v81
    %821 = vmatpush1.msra.mxu0 %v80
    %822 = vmatprep.subr.mxu0 %v77
    %823 = vmatpush1.msra.mxu0 %v76
    %824 = vmatprep.subr.mxu0 %v73
    %825 = vmatpush1.msra.mxu0 %v72
    %826 = vmatprep.subr.mxu0 %v69
    %827 = vmatpush1.msra.mxu0 %v68
    %828 = vmatprep.subr.mxu0 %v65
    %829 = vmatpush1.msra.mxu0 %v64
    %830 = vmatprep.subr.mxu0 %v61
    %831 = vmatpush1.msra.mxu0 %v60
    %832 = vmatprep.subr.mxu0 %v57
    %833 = vmatpush1.msra.mxu0 %v56
    %834 = vmatprep.subr.mxu0 %v53
    %835 = vmatpush1.msra.mxu0 %v52
    %836 = vmatprep.subr.mxu0 %v49
    %837 = vmatpush1.msra.mxu0 %v48
    %838 = vmatprep.subr.mxu0 %v45
    %839 = vmatpush1.msra.mxu0 %v44
    %840 = vmatprep.subr.mxu0 0.0
    %841 = vmatpush2.msra.mxu0 0.0
    %842 = vmatprep.subr.mxu0 0.0
    %843 = vmatpush2.msra.mxu0 0.0
    %844 = vmatprep.subr.mxu0 0.0
    %845 = vmatpush2.msra.mxu0 0.0
    %846 = vmatprep.subr.mxu0 0.0
    %847 = vmatpush2.msra.mxu0 0.0
    %848 = vmatprep.subr.mxu0 0.0
    %849 = vmatpush2.msra.mxu0 0.0
    %850 = vmatprep.subr.mxu0 0.0
    %851 = vmatpush2.msra.mxu0 0.0
    %852 = vmatprep.subr.mxu0 0.0
    %853 = vmatpush2.msra.mxu0 0.0
    %854 = vmatprep.subr.mxu0 0.0
    %855 = vmatpush2.msra.mxu0 0.0
    %856 = vmatprep.subr.mxu0 0.0
    %857 = vmatpush2.msra.mxu0 0.0
    %858 = vmatprep.subr.mxu0 0.0
    %859 = vmatpush2.msra.mxu0 0.0
    %860 = vmatprep.subr.mxu0 0.0
    %861 = vmatpush2.msra.mxu0 0.0
    %862 = vmatprep.subr.mxu0 0.0
    %863 = vmatpush2.msra.mxu0 0.0
    %864 = vmatprep.subr.mxu0 0.0
    %865 = vmatpush2.msra.mxu0 0.0
    %866 = vmatprep.subr.mxu0 0.0
    %867 = vmatpush2.msra.mxu0 0.0
    %868 = vmatprep.subr.mxu0 0.0
    %869 = vmatpush2.msra.mxu0 0.0
    %870 = vmatprep.subr.mxu0 0.0
    %871 = vmatpush2.msra.mxu0 0.0
    %872 = vmatprep.mubr.f32.mxu0 0.0
    %873 = vmatmul.mubr.f32.gmra.mxu0 %v802
    %v874 = vpop.f32.mrf.mxu0
    %v875 = vadd.f32 0.0, %v874
    %v876 = vpop.f32.mrf.mxu0
    %v877 = vadd.f32 0.0, %v876
    %878 = vdwg.mxu0
    %879 = vmatprep.subr.mxu0 %v107
    %880 = vmatpush1.msra.mxu0 %v106
    %881 = vmatprep.subr.mxu0 %v103
    %882 = vmatpush1.msra.mxu0 %v102
    %883 = vmatprep.subr.mxu0 %v99
    %884 = vmatpush1.msra.mxu0 %v98
    %885 = vmatprep.subr.mxu0 %v95
    %886 = vmatpush1.msra.mxu0 %v94
    %887 = vmatprep.subr.mxu0 %v91
    %888 = vmatpush1.msra.mxu0 %v90
    %889 = vmatprep.subr.mxu0 %v87
    %890 = vmatpush1.msra.mxu0 %v86
    %891 = vmatprep.subr.mxu0 %v83
    %892 = vmatpush1.msra.mxu0 %v82
    %893 = vmatprep.subr.mxu0 %v79
    %894 = vmatpush1.msra.mxu0 %v78
    %895 = vmatprep.subr.mxu0 %v75
    %896 = vmatpush1.msra.mxu0 %v74
    %897 = vmatprep.subr.mxu0 %v71
    %898 = vmatpush1.msra.mxu0 %v70
    %899 = vmatprep.subr.mxu0 %v67
    %900 = vmatpush1.msra.mxu0 %v66
    %901 = vmatprep.subr.mxu0 %v63
    %902 = vmatpush1.msra.mxu0 %v62
    %903 = vmatprep.subr.mxu0 %v59
    %904 = vmatpush1.msra.mxu0 %v58
    %905 = vmatprep.subr.mxu0 %v55
    %906 = vmatpush1.msra.mxu0 %v54
    %907 = vmatprep.subr.mxu0 %v51
    %908 = vmatpush1.msra.mxu0 %v50
    %909 = vmatprep.subr.mxu0 %v47
    %910 = vmatpush1.msra.mxu0 %v46
    %911 = vmatprep.subr.mxu0 0.0
    %912 = vmatpush2.msra.mxu0 0.0
    %913 = vmatprep.subr.mxu0 0.0
    %914 = vmatpush2.msra.mxu0 0.0
    %915 = vmatprep.subr.mxu0 0.0
    %916 = vmatpush2.msra.mxu0 0.0
    %917 = vmatprep.subr.mxu0 0.0
    %918 = vmatpush2.msra.mxu0 0.0
    %919 = vmatprep.subr.mxu0 0.0
    %920 = vmatpush2.msra.mxu0 0.0
    %921 = vmatprep.subr.mxu0 0.0
    %922 = vmatpush2.msra.mxu0 0.0
    %923 = vmatprep.subr.mxu0 0.0
    %924 = vmatpush2.msra.mxu0 0.0
    %925 = vmatprep.subr.mxu0 0.0
    %926 = vmatpush2.msra.mxu0 0.0
    %927 = vmatprep.subr.mxu0 0.0
    %928 = vmatpush2.msra.mxu0 0.0
    %929 = vmatprep.subr.mxu0 0.0
    %930 = vmatpush2.msra.mxu0 0.0
    %931 = vmatprep.subr.mxu0 0.0
    %932 = vmatpush2.msra.mxu0 0.0
    %933 = vmatprep.subr.mxu0 0.0
    %934 = vmatpush2.msra.mxu0 0.0
    %935 = vmatprep.subr.mxu0 0.0
    %936 = vmatpush2.msra.mxu0 0.0
    %937 = vmatprep.subr.mxu0 0.0
    %938 = vmatpush2.msra.mxu0 0.0
    %939 = vmatprep.subr.mxu0 0.0
    %940 = vmatpush2.msra.mxu0 0.0
    %941 = vmatprep.subr.mxu0 0.0
    %942 = vmatpush2.msra.mxu0 0.0
    %943 = vmatprep.mubr.f32.mxu0 0.0
    %944 = vmatmul.mubr.f32.gmra.mxu0 %v802
    %v945 = vpop.f32.mrf.mxu0
    %v946 = vadd.f32 0.0, %v945
    %v947 = vpop.f32.mrf.mxu0
    %v948 = vadd.f32 0.0, %v947
    %949 = vdwg.mxu0
    %v950 = vadd.f32 %v804, %v875
    %v951 = vadd.f32 %v805, %v877
    %v952 = vadd.f32 %v806, %v946
    %v953 = vadd.f32 %v807, %v948
    %v954 = vxor.u32 %v950, 2147483648
    %v955 = vxor.u32 %v951, 2147483648
    %v956 = vxor.u32 %v952, 2147483648
    %v957 = vmul.f32 %v954, 1.442695
    %v958 = vpow.pop %v957
    %v959 = vmul.f32 %v955, 1.442695
    %v960 = vpow.pop %v959
    %v961 = vmul.f32 %v956, 1.442695
    %v962 = vpow.pop %v961
    %v963 = vadd.f32 %v958, 1.0
    %v964 = vadd.f32 %v960, 1.0
    %v965 = vadd.f32 %v962, 1.0
    %v966 = vrcp.pop %v963
    %v967 = vmul.f32 1.0, %v966
    %v968 = vrcp.pop %v964
    %v969 = vmul.f32 1.0, %v968
    %v970 = vrcp.pop %v965
    %v971 = vmul.f32 1.0, %v970
    %v972 = vtanh.pop %v953
    %v973 = vmul.f32 %v969, %v800
    %v974 = vmul.f32 %v967, %v972
    %v975 = vadd.f32 %v973, %v974
    %v976 = vtanh.pop %v975
    %v977 = vmul.f32 %v971, %v976
    %s978 = scalar_lea.vmem [#allocation2], 160
    %v979 = vld [vmem:[%s978] sm:$0xff]
    %v980 = vld [vmem:[%s978 + $0x8] sm:$0xff]
    %v981 = vld [vmem:[%s978 + $0x10] sm:$0xff]
    %v982 = vld [vmem:[%s978 + $0x18] sm:$0xff]
    %983 = vmatprep.subr.mxu0 %v105
    %984 = vmatpush1.msra.mxu0 %v104
    %985 = vmatprep.subr.mxu0 %v101
    %986 = vmatpush1.msra.mxu0 %v100
    %987 = vmatprep.subr.mxu0 %v97
    %988 = vmatpush1.msra.mxu0 %v96
    %989 = vmatprep.subr.mxu0 %v93
    %990 = vmatpush1.msra.mxu0 %v92
    %991 = vmatprep.subr.mxu0 %v89
    %992 = vmatpush1.msra.mxu0 %v88
    %993 = vmatprep.subr.mxu0 %v85
    %994 = vmatpush1.msra.mxu0 %v84
    %995 = vmatprep.subr.mxu0 %v81
    %996 = vmatpush1.msra.mxu0 %v80
    %997 = vmatprep.subr.mxu0 %v77
    %998 = vmatpush1.msra.mxu0 %v76
    %999 = vmatprep.subr.mxu0 %v73
    %1000 = vmatpush1.msra.mxu0 %v72
    %1001 = vmatprep.subr.mxu0 %v69
    %1002 = vmatpush1.msra.mxu0 %v68
    %1003 = vmatprep.subr.mxu0 %v65
    %1004 = vmatpush1.msra.mxu0 %v64
    %1005 = vmatprep.subr.mxu0 %v61
    %1006 = vmatpush1.msra.mxu0 %v60
    %1007 = vmatprep.subr.mxu0 %v57
    %1008 = vmatpush1.msra.mxu0 %v56
    %1009 = vmatprep.subr.mxu0 %v53
    %1010 = vmatpush1.msra.mxu0 %v52
    %1011 = vmatprep.subr.mxu0 %v49
    %1012 = vmatpush1.msra.mxu0 %v48
    %1013 = vmatprep.subr.mxu0 %v45
    %1014 = vmatpush1.msra.mxu0 %v44
    %1015 = vmatprep.subr.mxu0 0.0
    %1016 = vmatpush2.msra.mxu0 0.0
    %1017 = vmatprep.subr.mxu0 0.0
    %1018 = vmatpush2.msra.mxu0 0.0
    %1019 = vmatprep.subr.mxu0 0.0
    %1020 = vmatpush2.msra.mxu0 0.0
    %1021 = vmatprep.subr.mxu0 0.0
    %1022 = vmatpush2.msra.mxu0 0.0
    %1023 = vmatprep.subr.mxu0 0.0
    %1024 = vmatpush2.msra.mxu0 0.0
    %1025 = vmatprep.subr.mxu0 0.0
    %1026 = vmatpush2.msra.mxu0 0.0
    %1027 = vmatprep.subr.mxu0 0.0
    %1028 = vmatpush2.msra.mxu0 0.0
    %1029 = vmatprep.subr.mxu0 0.0
    %1030 = vmatpush2.msra.mxu0 0.0
    %1031 = vmatprep.subr.mxu0 0.0
    %1032 = vmatpush2.msra.mxu0 0.0
    %1033 = vmatprep.subr.mxu0 0.0
    %1034 = vmatpush2.msra.mxu0 0.0
    %1035 = vmatprep.subr.mxu0 0.0
    %1036 = vmatpush2.msra.mxu0 0.0
    %1037 = vmatprep.subr.mxu0 0.0
    %1038 = vmatpush2.msra.mxu0 0.0
    %1039 = vmatprep.subr.mxu0 0.0
    %1040 = vmatpush2.msra.mxu0 0.0
    %1041 = vmatprep.subr.mxu0 0.0
    %1042 = vmatpush2.msra.mxu0 0.0
    %1043 = vmatprep.subr.mxu0 0.0
    %1044 = vmatpush2.msra.mxu0 0.0
    %1045 = vmatprep.subr.mxu0 0.0
    %1046 = vmatpush2.msra.mxu0 0.0
    %1047 = vmatprep.mubr.f32.mxu0 0.0
    %1048 = vmatmul.mubr.f32.gmra.mxu0 %v977
    %v1049 = vpop.f32.mrf.mxu0
    %v1050 = vadd.f32 0.0, %v1049
    %v1051 = vpop.f32.mrf.mxu0
    %v1052 = vadd.f32 0.0, %v1051
    %1053 = vdwg.mxu0
    %1054 = vmatprep.subr.mxu0 %v107
    %1055 = vmatpush1.msra.mxu0 %v106
    %1056 = vmatprep.subr.mxu0 %v103
    %1057 = vmatpush1.msra.mxu0 %v102
    %1058 = vmatprep.subr.mxu0 %v99
    %1059 = vmatpush1.msra.mxu0 %v98
    %1060 = vmatprep.subr.mxu0 %v95
    %1061 = vmatpush1.msra.mxu0 %v94
    %1062 = vmatprep.subr.mxu0 %v91
    %1063 = vmatpush1.msra.mxu0 %v90
    %1064 = vmatprep.subr.mxu0 %v87
    %1065 = vmatpush1.msra.mxu0 %v86
    %1066 = vmatprep.subr.mxu0 %v83
    %1067 = vmatpush1.msra.mxu0 %v82
    %1068 = vmatprep.subr.mxu0 %v79
    %1069 = vmatpush1.msra.mxu0 %v78
    %1070 = vmatprep.subr.mxu0 %v75
    %1071 = vmatpush1.msra.mxu0 %v74
    %1072 = vmatprep.subr.mxu0 %v71
    %1073 = vmatpush1.msra.mxu0 %v70
    %1074 = vmatprep.subr.mxu0 %v67
    %1075 = vmatpush1.msra.mxu0 %v66
    %1076 = vmatprep.subr.mxu0 %v63
    %1077 = vmatpush1.msra.mxu0 %v62
    %1078 = vmatprep.subr.mxu0 %v59
    %1079 = vmatpush1.msra.mxu0 %v58
    %1080 = vmatprep.subr.mxu0 %v55
    %1081 = vmatpush1.msra.mxu0 %v54
    %1082 = vmatprep.subr.mxu0 %v51
    %1083 = vmatpush1.msra.mxu0 %v50
    %1084 = vmatprep.subr.mxu0 %v47
    %1085 = vmatpush1.msra.mxu0 %v46
    %1086 = vmatprep.subr.mxu0 0.0
    %1087 = vmatpush2.msra.mxu0 0.0
    %1088 = vmatprep.subr.mxu0 0.0
    %1089 = vmatpush2.msra.mxu0 0.0
    %1090 = vmatprep.subr.mxu0 0.0
    %1091 = vmatpush2.msra.mxu0 0.0
    %1092 = vmatprep.subr.mxu0 0.0
    %1093 = vmatpush2.msra.mxu0 0.0
    %1094 = vmatprep.subr.mxu0 0.0
    %1095 = vmatpush2.msra.mxu0 0.0
    %1096 = vmatprep.subr.mxu0 0.0
    %1097 = vmatpush2.msra.mxu0 0.0
    %1098 = vmatprep.subr.mxu0 0.0
    %1099 = vmatpush2.msra.mxu0 0.0
    %1100 = vmatprep.subr.mxu0 0.0
    %1101 = vmatpush2.msra.mxu0 0.0
    %1102 = vmatprep.subr.mxu0 0.0
    %1103 = vmatpush2.msra.mxu0 0.0
    %1104 = vmatprep.subr.mxu0 0.0
    %1105 = vmatpush2.msra.mxu0 0.0
    %1106 = vmatprep.subr.mxu0 0.0
    %1107 = vmatpush2.msra.mxu0 0.0
    %1108 = vmatprep.subr.mxu0 0.0
    %1109 = vmatpush2.msra.mxu0 0.0
    %1110 = vmatprep.subr.mxu0 0.0
    %1111 = vmatpush2.msra.mxu0 0.0
    %1112 = vmatprep.subr.mxu0 0.0
    %1113 = vmatpush2.msra.mxu0 0.0
    %1114 = vmatprep.subr.mxu0 0.0
    %1115 = vmatpush2.msra.mxu0 0.0
    %1116 = vmatprep.subr.mxu0 0.0
    %1117 = vmatpush2.msra.mxu0 0.0
    %1118 = vmatprep.mubr.f32.mxu0 0.0
    %1119 = vmatmul.mubr.f32.gmra.mxu0 %v977
    %v1120 = vpop.f32.mrf.mxu0
    %v1121 = vadd.f32 0.0, %v1120
    %v1122 = vpop.f32.mrf.mxu0
    %v1123 = vadd.f32 0.0, %v1122
    %1124 = vdwg.mxu0
    %v1125 = vadd.f32 %v979, %v1050
    %v1126 = vadd.f32 %v980, %v1052
    %v1127 = vadd.f32 %v981, %v1121
    %v1128 = vadd.f32 %v982, %v1123
    %v1129 = vxor.u32 %v1125, 2147483648
    %v1130 = vxor.u32 %v1126, 2147483648
    %v1131 = vxor.u32 %v1127, 2147483648
    %v1132 = vmul.f32 %v1129, 1.442695
    %v1133 = vpow.pop %v1132
    %v1134 = vmul.f32 %v1130, 1.442695
    %v1135 = vpow.pop %v1134
    %v1136 = vmul.f32 %v1131, 1.442695
    %v1137 = vpow.pop %v1136
    %v1138 = vadd.f32 %v1133, 1.0
    %v1139 = vadd.f32 %v1135, 1.0
    %v1140 = vadd.f32 %v1137, 1.0
    %v1141 = vrcp.pop %v1138
    %v1142 = vmul.f32 1.0, %v1141
    %v1143 = vrcp.pop %v1139
    %v1144 = vmul.f32 1.0, %v1143
    %v1145 = vrcp.pop %v1140
    %v1146 = vmul.f32 1.0, %v1145
    %v1147 = vtanh.pop %v1128
    %v1148 = vmul.f32 %v1144, %v975
    %v1149 = vmul.f32 %v1142, %v1147
    %v1150 = vadd.f32 %v1148, %v1149
    %v1151 = vtanh.pop %v1150
    %v1152 = vmul.f32 %v1146, %v1151
    %s1153 = scalar_lea.vmem [#allocation2], 192
    %v1154 = vld [vmem:[%s1153] sm:$0xff]
    %v1155 = vld [vmem:[%s1153 + $0x8] sm:$0xff]
    %v1156 = vld [vmem:[%s1153 + $0x10] sm:$0xff]
    %v1157 = vld [vmem:[%s1153 + $0x18] sm:$0xff]
    %1158 = vmatprep.subr.mxu0 %v105
    %1159 = vmatpush1.msra.mxu0 %v104
    %1160 = vmatprep.subr.mxu0 %v101
    %1161 = vmatpush1.msra.mxu0 %v100
    %1162 = vmatprep.subr.mxu0 %v97
    %1163 = vmatpush1.msra.mxu0 %v96
    %1164 = vmatprep.subr.mxu0 %v93
    %1165 = vmatpush1.msra.mxu0 %v92
    %1166 = vmatprep.subr.mxu0 %v89
    %1167 = vmatpush1.msra.mxu0 %v88
    %1168 = vmatprep.subr.mxu0 %v85
    %1169 = vmatpush1.msra.mxu0 %v84
    %1170 = vmatprep.subr.mxu0 %v81
    %1171 = vmatpush1.msra.mxu0 %v80
    %1172 = vmatprep.subr.mxu0 %v77
    %1173 = vmatpush1.msra.mxu0 %v76
    %1174 = vmatprep.subr.mxu0 %v73
    %1175 = vmatpush1.msra.mxu0 %v72
    %1176 = vmatprep.subr.mxu0 %v69
    %1177 = vmatpush1.msra.mxu0 %v68
    %1178 = vmatprep.subr.mxu0 %v65
    %1179 = vmatpush1.msra.mxu0 %v64
    %1180 = vmatprep.subr.mxu0 %v61
    %1181 = vmatpush1.msra.mxu0 %v60
    %1182 = vmatprep.subr.mxu0 %v57
    %1183 = vmatpush1.msra.mxu0 %v56
    %1184 = vmatprep.subr.mxu0 %v53
    %1185 = vmatpush1.msra.mxu0 %v52
    %1186 = vmatprep.subr.mxu0 %v49
    %1187 = vmatpush1.msra.mxu0 %v48
    %1188 = vmatprep.subr.mxu0 %v45
    %1189 = vmatpush1.msra.mxu0 %v44
    %1190 = vmatprep.subr.mxu0 0.0
    %1191 = vmatpush2.msra.mxu0 0.0
    %1192 = vmatprep.subr.mxu0 0.0
    %1193 = vmatpush2.msra.mxu0 0.0
    %1194 = vmatprep.subr.mxu0 0.0
    %1195 = vmatpush2.msra.mxu0 0.0
    %1196 = vmatprep.subr.mxu0 0.0
    %1197 = vmatpush2.msra.mxu0 0.0
    %1198 = vmatprep.subr.mxu0 0.0
    %1199 = vmatpush2.msra.mxu0 0.0
    %1200 = vmatprep.subr.mxu0 0.0
    %1201 = vmatpush2.msra.mxu0 0.0
    %1202 = vmatprep.subr.mxu0 0.0
    %1203 = vmatpush2.msra.mxu0 0.0
    %1204 = vmatprep.subr.mxu0 0.0
    %1205 = vmatpush2.msra.mxu0 0.0
    %1206 = vmatprep.subr.mxu0 0.0
    %1207 = vmatpush2.msra.mxu0 0.0
    %1208 = vmatprep.subr.mxu0 0.0
    %1209 = vmatpush2.msra.mxu0 0.0
    %1210 = vmatprep.subr.mxu0 0.0
    %1211 = vmatpush2.msra.mxu0 0.0
    %1212 = vmatprep.subr.mxu0 0.0
    %1213 = vmatpush2.msra.mxu0 0.0
    %1214 = vmatprep.subr.mxu0 0.0
    %1215 = vmatpush2.msra.mxu0 0.0
    %1216 = vmatprep.subr.mxu0 0.0
    %1217 = vmatpush2.msra.mxu0 0.0
    %1218 = vmatprep.subr.mxu0 0.0
    %1219 = vmatpush2.msra.mxu0 0.0
    %1220 = vmatprep.subr.mxu0 0.0
    %1221 = vmatpush2.msra.mxu0 0.0
    %1222 = vmatprep.mubr.f32.mxu0 0.0
    %1223 = vmatmul.mubr.f32.gmra.mxu0 %v1152
    %v1224 = vpop.f32.mrf.mxu0
    %v1225 = vadd.f32 0.0, %v1224
    %v1226 = vpop.f32.mrf.mxu0
    %v1227 = vadd.f32 0.0, %v1226
    %1228 = vdwg.mxu0
    %1229 = vmatprep.subr.mxu0 %v107
    %1230 = vmatpush1.msra.mxu0 %v106
    %1231 = vmatprep.subr.mxu0 %v103
    %1232 = vmatpush1.msra.mxu0 %v102
    %1233 = vmatprep.subr.mxu0 %v99
    %1234 = vmatpush1.msra.mxu0 %v98
    %1235 = vmatprep.subr.mxu0 %v95
    %1236 = vmatpush1.msra.mxu0 %v94
    %1237 = vmatprep.subr.mxu0 %v91
    %1238 = vmatpush1.msra.mxu0 %v90
    %1239 = vmatprep.subr.mxu0 %v87
    %1240 = vmatpush1.msra.mxu0 %v86
    %1241 = vmatprep.subr.mxu0 %v83
    %1242 = vmatpush1.msra.mxu0 %v82
    %1243 = vmatprep.subr.mxu0 %v79
    %1244 = vmatpush1.msra.mxu0 %v78
    %1245 = vmatprep.subr.mxu0 %v75
    %1246 = vmatpush1.msra.mxu0 %v74
    %1247 = vmatprep.subr.mxu0 %v71
    %1248 = vmatpush1.msra.mxu0 %v70
    %1249 = vmatprep.subr.mxu0 %v67
    %1250 = vmatpush1.msra.mxu0 %v66
    %1251 = vmatprep.subr.mxu0 %v63
    %1252 = vmatpush1.msra.mxu0 %v62
    %1253 = vmatprep.subr.mxu0 %v59
    %1254 = vmatpush1.msra.mxu0 %v58
    %1255 = vmatprep.subr.mxu0 %v55
    %1256 = vmatpush1.msra.mxu0 %v54
    %1257 = vmatprep.subr.mxu0 %v51
    %1258 = vmatpush1.msra.mxu0 %v50
    %1259 = vmatprep.subr.mxu0 %v47
    %1260 = vmatpush1.msra.mxu0 %v46
    %1261 = vmatprep.subr.mxu0 0.0
    %1262 = vmatpush2.msra.mxu0 0.0
    %1263 = vmatprep.subr.mxu0 0.0
    %1264 = vmatpush2.msra.mxu0 0.0
    %1265 = vmatprep.subr.mxu0 0.0
    %1266 = vmatpush2.msra.mxu0 0.0
    %1267 = vmatprep.subr.mxu0 0.0
    %1268 = vmatpush2.msra.mxu0 0.0
    %1269 = vmatprep.subr.mxu0 0.0
    %1270 = vmatpush2.msra.mxu0 0.0
    %1271 = vmatprep.subr.mxu0 0.0
    %1272 = vmatpush2.msra.mxu0 0.0
    %1273 = vmatprep.subr.mxu0 0.0
    %1274 = vmatpush2.msra.mxu0 0.0
    %1275 = vmatprep.subr.mxu0 0.0
    %1276 = vmatpush2.msra.mxu0 0.0
    %1277 = vmatprep.subr.mxu0 0.0
    %1278 = vmatpush2.msra.mxu0 0.0
    %1279 = vmatprep.subr.mxu0 0.0
    %1280 = vmatpush2.msra.mxu0 0.0
    %1281 = vmatprep.subr.mxu0 0.0
    %1282 = vmatpush2.msra.mxu0 0.0
    %1283 = vmatprep.subr.mxu0 0.0
    %1284 = vmatpush2.msra.mxu0 0.0
    %1285 = vmatprep.subr.mxu0 0.0
    %1286 = vmatpush2.msra.mxu0 0.0
    %1287 = vmatprep.subr.mxu0 0.0
    %1288 = vmatpush2.msra.mxu0 0.0
    %1289 = vmatprep.subr.mxu0 0.0
    %1290 = vmatpush2.msra.mxu0 0.0
    %1291 = vmatprep.subr.mxu0 0.0
    %1292 = vmatpush2.msra.mxu0 0.0
    %1293 = vmatprep.mubr.f32.mxu0 0.0
    %1294 = vmatmul.mubr.f32.gmra.mxu0 %v1152
    %v1295 = vpop.f32.mrf.mxu0
    %v1296 = vadd.f32 0.0, %v1295
    %v1297 = vpop.f32.mrf.mxu0
    %v1298 = vadd.f32 0.0, %v1297
    %1299 = vdwg.mxu0
    %v1300 = vadd.f32 %v1154, %v1225
    %v1301 = vadd.f32 %v1155, %v1227
    %v1302 = vadd.f32 %v1156, %v1296
    %v1303 = vadd.f32 %v1157, %v1298
    %v1304 = vxor.u32 %v1300, 2147483648
    %v1305 = vxor.u32 %v1301, 2147483648
    %v1306 = vxor.u32 %v1302, 2147483648
    %v1307 = vmul.f32 %v1304, 1.442695
    %v1308 = vpow.pop %v1307
    %v1309 = vmul.f32 %v1305, 1.442695
    %v1310 = vpow.pop %v1309
    %v1311 = vmul.f32 %v1306, 1.442695
    %v1312 = vpow.pop %v1311
    %v1313 = vadd.f32 %v1308, 1.0
    %v1314 = vadd.f32 %v1310, 1.0
    %v1315 = vadd.f32 %v1312, 1.0
    %v1316 = vrcp.pop %v1313
    %v1317 = vmul.f32 1.0, %v1316
    %v1318 = vrcp.pop %v1314
    %v1319 = vmul.f32 1.0, %v1318
    %v1320 = vrcp.pop %v1315
    %v1321 = vmul.f32 1.0, %v1320
    %v1322 = vtanh.pop %v1303
    %v1323 = vmul.f32 %v1319, %v1150
    %v1324 = vmul.f32 %v1317, %v1322
    %v1325 = vadd.f32 %v1323, %v1324
    %v1326 = vtanh.pop %v1325
    %v1327 = vmul.f32 %v1321, %v1326
    %s1328 = scalar_lea.vmem [#allocation2], 224
    %v1329 = vld [vmem:[%s1328] sm:$0xff]
    %v1330 = vld [vmem:[%s1328 + $0x8] sm:$0xff]
    %v1331 = vld [vmem:[%s1328 + $0x10] sm:$0xff]
    %v1332 = vld [vmem:[%s1328 + $0x18] sm:$0xff]
    %1333 = vmatprep.subr.mxu0 %v105
    %1334 = vmatpush1.msra.mxu0 %v104
    %1335 = vmatprep.subr.mxu0 %v101
    %1336 = vmatpush1.msra.mxu0 %v100
    %1337 = vmatprep.subr.mxu0 %v97
    %1338 = vmatpush1.msra.mxu0 %v96
    %1339 = vmatprep.subr.mxu0 %v93
    %1340 = vmatpush1.msra.mxu0 %v92
    %1341 = vmatprep.subr.mxu0 %v89
    %1342 = vmatpush1.msra.mxu0 %v88
    %1343 = vmatprep.subr.mxu0 %v85
    %1344 = vmatpush1.msra.mxu0 %v84
    %1345 = vmatprep.subr.mxu0 %v81
    %1346 = vmatpush1.msra.mxu0 %v80
    %1347 = vmatprep.subr.mxu0 %v77
    %1348 = vmatpush1.msra.mxu0 %v76
    %1349 = vmatprep.subr.mxu0 %v73
    %1350 = vmatpush1.msra.mxu0 %v72
    %1351 = vmatprep.subr.mxu0 %v69
    %1352 = vmatpush1.msra.mxu0 %v68
    %1353 = vmatprep.subr.mxu0 %v65
    %1354 = vmatpush1.msra.mxu0 %v64
    %1355 = vmatprep.subr.mxu0 %v61
    %1356 = vmatpush1.msra.mxu0 %v60
    %1357 = vmatprep.subr.mxu0 %v57
    %1358 = vmatpush1.msra.mxu0 %v56
    %1359 = vmatprep.subr.mxu0 %v53
    %1360 = vmatpush1.msra.mxu0 %v52
    %1361 = vmatprep.subr.mxu0 %v49
    %1362 = vmatpush1.msra.mxu0 %v48
    %1363 = vmatprep.subr.mxu0 %v45
    %1364 = vmatpush1.msra.mxu0 %v44
    %1365 = vmatprep.subr.mxu0 0.0
    %1366 = vmatpush2.msra.mxu0 0.0
    %1367 = vmatprep.subr.mxu0 0.0
    %1368 = vmatpush2.msra.mxu0 0.0
    %1369 = vmatprep.subr.mxu0 0.0
    %1370 = vmatpush2.msra.mxu0 0.0
    %1371 = vmatprep.subr.mxu0 0.0
    %1372 = vmatpush2.msra.mxu0 0.0
    %1373 = vmatprep.subr.mxu0 0.0
    %1374 = vmatpush2.msra.mxu0 0.0
    %1375 = vmatprep.subr.mxu0 0.0
    %1376 = vmatpush2.msra.mxu0 0.0
    %1377 = vmatprep.subr.mxu0 0.0
    %1378 = vmatpush2.msra.mxu0 0.0
    %1379 = vmatprep.subr.mxu0 0.0
    %1380 = vmatpush2.msra.mxu0 0.0
    %1381 = vmatprep.subr.mxu0 0.0
    %1382 = vmatpush2.msra.mxu0 0.0
    %1383 = vmatprep.subr.mxu0 0.0
    %1384 = vmatpush2.msra.mxu0 0.0
    %1385 = vmatprep.subr.mxu0 0.0
    %1386 = vmatpush2.msra.mxu0 0.0
    %1387 = vmatprep.subr.mxu0 0.0
    %1388 = vmatpush2.msra.mxu0 0.0
    %1389 = vmatprep.subr.mxu0 0.0
    %1390 = vmatpush2.msra.mxu0 0.0
    %1391 = vmatprep.subr.mxu0 0.0
    %1392 = vmatpush2.msra.mxu0 0.0
    %1393 = vmatprep.subr.mxu0 0.0
    %1394 = vmatpush2.msra.mxu0 0.0
    %1395 = vmatprep.subr.mxu0 0.0
    %1396 = vmatpush2.msra.mxu0 0.0
    %1397 = vmatprep.mubr.f32.mxu0 0.0
    %1398 = vmatmul.mubr.f32.gmra.mxu0 %v1327
    %v1399 = vpop.f32.mrf.mxu0
    %v1400 = vadd.f32 0.0, %v1399
    %v1401 = vpop.f32.mrf.mxu0
    %v1402 = vadd.f32 0.0, %v1401
    %1403 = vdwg.mxu0
    %1404 = vmatprep.subr.mxu0 %v107
    %1405 = vmatpush1.msra.mxu0 %v106
    %1406 = vmatprep.subr.mxu0 %v103
    %1407 = vmatpush1.msra.mxu0 %v102
    %1408 = vmatprep.subr.mxu0 %v99
    %1409 = vmatpush1.msra.mxu0 %v98
    %1410 = vmatprep.subr.mxu0 %v95
    %1411 = vmatpush1.msra.mxu0 %v94
    %1412 = vmatprep.subr.mxu0 %v91
    %1413 = vmatpush1.msra.mxu0 %v90
    %1414 = vmatprep.subr.mxu0 %v87
    %1415 = vmatpush1.msra.mxu0 %v86
    %1416 = vmatprep.subr.mxu0 %v83
    %1417 = vmatpush1.msra.mxu0 %v82
    %1418 = vmatprep.subr.mxu0 %v79
    %1419 = vmatpush1.msra.mxu0 %v78
    %1420 = vmatprep.subr.mxu0 %v75
    %1421 = vmatpush1.msra.mxu0 %v74
    %1422 = vmatprep.subr.mxu0 %v71
    %1423 = vmatpush1.msra.mxu0 %v70
    %1424 = vmatprep.subr.mxu0 %v67
    %1425 = vmatpush1.msra.mxu0 %v66
    %1426 = vmatprep.subr.mxu0 %v63
    %1427 = vmatpush1.msra.mxu0 %v62
    %1428 = vmatprep.subr.mxu0 %v59
    %1429 = vmatpush1.msra.mxu0 %v58
    %1430 = vmatprep.subr.mxu0 %v55
    %1431 = vmatpush1.msra.mxu0 %v54
    %1432 = vmatprep.subr.mxu0 %v51
    %1433 = vmatpush1.msra.mxu0 %v50
    %1434 = vmatprep.subr.mxu0 %v47
    %1435 = vmatpush1.msra.mxu0 %v46
    %1436 = vmatprep.subr.mxu0 0.0
    %1437 = vmatpush2.msra.mxu0 0.0
    %1438 = vmatprep.subr.mxu0 0.0
    %1439 = vmatpush2.msra.mxu0 0.0
    %1440 = vmatprep.subr.mxu0 0.0
    %1441 = vmatpush2.msra.mxu0 0.0
    %1442 = vmatprep.subr.mxu0 0.0
    %1443 = vmatpush2.msra.mxu0 0.0
    %1444 = vmatprep.subr.mxu0 0.0
    %1445 = vmatpush2.msra.mxu0 0.0
    %1446 = vmatprep.subr.mxu0 0.0
    %1447 = vmatpush2.msra.mxu0 0.0
    %1448 = vmatprep.subr.mxu0 0.0
    %1449 = vmatpush2.msra.mxu0 0.0
    %1450 = vmatprep.subr.mxu0 0.0
    %1451 = vmatpush2.msra.mxu0 0.0
    %1452 = vmatprep.subr.mxu0 0.0
    %1453 = vmatpush2.msra.mxu0 0.0
    %1454 = vmatprep.subr.mxu0 0.0
    %1455 = vmatpush2.msra.mxu0 0.0
    %1456 = vmatprep.subr.mxu0 0.0
    %1457 = vmatpush2.msra.mxu0 0.0
    %1458 = vmatprep.subr.mxu0 0.0
    %1459 = vmatpush2.msra.mxu0 0.0
    %1460 = vmatprep.subr.mxu0 0.0
    %1461 = vmatpush2.msra.mxu0 0.0
    %1462 = vmatprep.subr.mxu0 0.0
    %1463 = vmatpush2.msra.mxu0 0.0
    %1464 = vmatprep.subr.mxu0 0.0
    %1465 = vmatpush2.msra.mxu0 0.0
    %1466 = vmatprep.subr.mxu0 0.0
    %1467 = vmatpush2.msra.mxu0 0.0
    %1468 = vmatprep.mubr.f32.mxu0 0.0
    %1469 = vmatmul.mubr.f32.gmra.mxu0 %v1327
    %v1470 = vpop.f32.mrf.mxu0
    %v1471 = vadd.f32 0.0, %v1470
    %v1472 = vpop.f32.mrf.mxu0
    %v1473 = vadd.f32 0.0, %v1472
    %1474 = vdwg.mxu0
    %v1475 = vadd.f32 %v1329, %v1400
    %v1476 = vadd.f32 %v1330, %v1402
    %v1477 = vadd.f32 %v1331, %v1471
    %v1478 = vadd.f32 %v1332, %v1473
    %v1479 = vxor.u32 %v1475, 2147483648
    %v1480 = vxor.u32 %v1476, 2147483648
    %v1481 = vxor.u32 %v1477, 2147483648
    %v1482 = vmul.f32 %v1479, 1.442695
    %v1483 = vpow.pop %v1482
    %v1484 = vmul.f32 %v1480, 1.442695
    %v1485 = vpow.pop %v1484
    %v1486 = vmul.f32 %v1481, 1.442695
    %v1487 = vpow.pop %v1486
    %v1488 = vadd.f32 %v1483, 1.0
    %v1489 = vadd.f32 %v1485, 1.0
    %v1490 = vadd.f32 %v1487, 1.0
    %v1491 = vrcp.pop %v1488
    %v1492 = vmul.f32 1.0, %v1491
    %v1493 = vrcp.pop %v1489
    %v1494 = vmul.f32 1.0, %v1493
    %v1495 = vrcp.pop %v1490
    %v1496 = vmul.f32 1.0, %v1495
    %v1497 = vtanh.pop %v1478
    %v1498 = vmul.f32 %v1494, %v1325
    %v1499 = vmul.f32 %v1492, %v1497
    %v1500 = vadd.f32 %v1498, %v1499
    %v1501 = vtanh.pop %v1500
    %v1502 = vmul.f32 %v1496, %v1501
    %1503 = vst [vmem:[#allocation7] sm:$0xff] %v1502
    // Predicated region
    $region18: #{tpu_custom_call.1} parent=1 // pred_check
      _
    $region19: #{tpu_custom_call.1} parent=1 // pred_check_branch
      %1505 = sbr.rel (0) target = $region21
    $region20: #{tpu_custom_call.1} parent=1 // pred_region
      %s1507 = ssub.s32 128, 128
      %1508 = vsyncadd [#allocation4], %s1507
      %s1510 = sshll.u32 [#allocation7], 4
      %s1511 = int_to_ptr.vmem [resolvable:$true] %s1510
      %1513 = dma.vmem_to_hbm [thread:$0]  %s1511, 128, %s2, [#allocation4]
    $region21: #{tpu_custom_call.1} parent=1 // pred_fallthru
      _
    // Predicated region
    $region22: #{tpu_custom_call.1} parent=1 // pred_check
      _
    $region23: #{tpu_custom_call.1} parent=1 // pred_check_branch
      %1515 = sbr.rel (0) target = $region25
    $region24: #{tpu_custom_call.1} parent=1 // pred_region
      %1516 = dma.done [#allocation4], 128
    $region25: #{tpu_custom_call.1} parent=1 // pred_fallthru
      _
    %1517 = vsyncpa [#allocation3], 1
    %1518 = vsyncpa [#allocation6], 1
    %1519 = vsyncpa [#allocation4], 1

</llo_original>
